<compile_context>
chip_gen: v6e
topology: v6e:2x2x1
jax: 0.10.0
libtpu: 0.0.40
codegen_flags: <defaults>
</compile_context>

<pallas_src>
import math

import jax
import jax.numpy as jnp
from jax.experimental import pallas as pl
from jax.experimental.pallas import tpu as pltpu


def _round_up(x, m):
    return ((x + m - 1) // m) * m


def timestep_embedder_kernel(t_ref, freqs_ref, w1_ref, b1_ref, w2_ref, b2_ref,
                             out_ref):
    # t_ref:     (bn, 1)      f32  (block of timesteps, streams over the grid)
    # freqs_ref: (1, half)    f32  (pe_scale folded in; VMEM-resident)
    # w1_ref:    (dim, Hp)    bf16 (stacked [cos-rows; sin-rows]; resident)
    # b1_ref:    (1, Hp)      f32
    # w2_ref:    (Hp, Hp)     bf16 (resident)
    # b2_ref:    (1, Hp)      f32
    # out_ref:   (bn, Hp)     bf16 (or f32 if requested)
    t = t_ref[...]                                # (bn, 1)
    args = t * freqs_ref[...]                     # (bn, half) f32 on the VPU

    # half is a multiple of 128 lanes -> concat is pure vreg placement.
    emb = jnp.concatenate([jnp.cos(args), jnp.sin(args)], axis=-1)
    emb = emb.astype(w1_ref.dtype)                # (bn, dim) bf16 MXU operand

    # First Linear: single K=dim dot (fills the 256-deep MXU in one pass).
    h = (jnp.dot(emb, w1_ref[...], preferred_element_type=jnp.float32)
         + b1_ref[...])                           # (bn, Hp) f32

    # SiLU: one EUP exp push + approximate reciprocal (cheaper than sigmoid's
    # exp + exact divide; EUP slot is shared with sin/cos above).
    h = h * pl.reciprocal(1.0 + jnp.exp(-h), approx=True)

    # Second Linear.
    out = (jnp.dot(h.astype(w2_ref.dtype), w2_ref[...],
                   preferred_element_type=jnp.float32)
           + b2_ref[...])
    out_ref[...] = out.astype(out_ref.dtype)


def timestep_embedder(t, w1, b1, w2, b2, *,
                      frequency_embedding_size=256,
                      pe_scale=1000.0,
                      max_period=10000.0,
                      block_n=512,
                      out_dtype=jnp.bfloat16):
    """t: (N,) float timesteps. w1: (freq_dim, H), b1: (H,), w2: (H, H), b2: (H,).
    Returns (N, H) in out_dtype (bf16 by default; f32 accumulation inside),
    matching TimestepEmbedder.forward."""
    dim = frequency_embedding_size
    # TODO(synk): odd `dim` zero-pad branch of timestep_embedding not implemented.
    assert dim % 2 == 0, "odd frequency_embedding_size not supported"
    half = dim // 2
    n = t.shape[0]
    hidden = w1.shape[1]
    assert w1.shape == (dim, hidden) and w2.shape == (hidden, hidden)
    assert b1.shape == (hidden,) and b2.shape == (hidden,)

    # ---- wrapper-side layout prep (constant folds / padding, plain JAX glue) ----
    # freqs with pe_scale folded in: pe_scale * exp(-ln(max_period)*k/half).
    freqs = (pe_scale * jnp.exp(
        -math.log(max_period) * jnp.arange(half, dtype=jnp.float32) / half)
    ).reshape(1, half)

    # Pad hidden up to a multiple of 256 (full MXU result tile on v6e/v7x,
    # lane-dense output). Zero padding is mathematically exact.
    hp = _round_up(hidden, 256)
    pad_h = hp - hidden
    w1p = jnp.pad(w1, ((0, 0), (0, pad_h))).astype(jnp.bfloat16)   # stacked cos|sin
    w2p = jnp.pad(w2, ((0, pad_h), (0, pad_h))).astype(jnp.bfloat16)
    b1p = jnp.pad(b1, (0, pad_h)).reshape(1, hp).astype(jnp.float32)
    b2p = jnp.pad(b2, (0, pad_h)).reshape(1, hp).astype(jnp.float32)

    # Row-block size: aim for >= 2 grid steps so the "parallel" grid axis can
    # shard across both v7x TensorCores (1-TC chips only pay ~0.35 us/step).
    out_itemsize = jnp.dtype(out_dtype).itemsize
    row_align = 16 if out_itemsize < 4 else 8
    bn = max(row_align, min(block_n, _round_up(pl.cdiv(n, 2), row_align)))

    # Explicit VMEM budget: resident weights + double-buffered t/out blocks +
    # in-kernel f32 temporaries (emb, h, out). Shrink bn if it overflows.
    weight_bytes = (dim * hp + hp * hp) * 2 + 2 * hp * 4 + half * 4

    def _block_bytes(b):
        return 2 * b * 4 + 2 * b * hp * out_itemsize + b * (dim + 2 * hp) * 4

    while bn > 64 and weight_bytes + _block_bytes(bn) > (40 << 20):
        bn //= 2
    vmem_limit = int(min(max(32 << 20, 2 * (weight_bytes + _block_bytes(bn))),
                         48 << 20))   # <= 48 MiB: safe on v7x's 64 MiB VMEM

    n_pad = _round_up(n, bn)
    t2d = jnp.pad(t.astype(jnp.float32), (0, n_pad - n)).reshape(n_pad, 1)

    grid = (n_pad // bn,)
    const = lambda i: (0, 0)          # grid-invariant: stays VMEM-resident
    out_padded = pl.pallas_call(
        timestep_embedder_kernel,
        out_shape=jax.ShapeDtypeStruct((n_pad, hp), out_dtype),
        grid=grid,
        in_specs=[
            pl.BlockSpec((bn, 1), lambda i: (i, 0)),     # t streams over grid
            pl.BlockSpec((1, half), const),              # freqs
            pl.BlockSpec((dim, hp), const),              # W1 (stacked cos|sin)
            pl.BlockSpec((1, hp), const),                # b1
            pl.BlockSpec((hp, hp), const),               # W2
            pl.BlockSpec((1, hp), const),                # b2
        ],
        out_specs=pl.BlockSpec((bn, hp), lambda i: (i, 0)),
        compiler_params=pltpu.CompilerParams(
            dimension_semantics=("parallel",),
            vmem_limit_bytes=vmem_limit),
    )(t2d, freqs, w1p, b1p, w2p, b2p)

    return out_padded[:n, :hidden]


if __name__ == "__main__":
    # Small deterministic setup: batch N=48 (exercises 2 grid steps + row
    # padding), hidden_size=32, freq_emb_size=256.
    N = 48
    HIDDEN = 32
    FREQ_DIM = 256
    PE_SCALE = 1000.0

    key = jax.random.PRNGKey(0)
    k_t, k_w1, k_b1, k_w2, k_b2 = jax.random.split(key, 5)

    t = jax.random.uniform(k_t, (N,), dtype=jnp.float32)
    # Weights stored as (in, out); equivalent to nn.Linear's weight.T.
    w1 = jax.random.normal(k_w1, (FREQ_DIM, HIDDEN), dtype=jnp.float32) * 0.02
    b1 = jax.random.normal(k_b1, (HIDDEN,), dtype=jnp.float32) * 0.02
    w2 = jax.random.normal(k_w2, (HIDDEN, HIDDEN), dtype=jnp.float32) * 0.02
    b2 = jax.random.normal(k_b2, (HIDDEN,), dtype=jnp.float32) * 0.02

    out = timestep_embedder(t, w1, b1, w2, b2,
                            frequency_embedding_size=FREQ_DIM, pe_scale=PE_SCALE)
    jax.block_until_ready(out)
    assert out.shape == (N, HIDDEN)
    out_f32 = out.astype(jnp.float32)

    # Reference 1: same bf16-matmul / f32-accumulate path, pure JAX (tight check).
    half = FREQ_DIM // 2
    freqs = jnp.exp(-math.log(10000.0) * jnp.arange(half, dtype=jnp.float32) / half)
    args = PE_SCALE * t[:, None] * freqs[None, :]
    emb_bf = jnp.concatenate([jnp.cos(args), jnp.sin(args)], axis=-1).astype(jnp.bfloat16)
    h = (jnp.dot(emb_bf, w1.astype(jnp.bfloat16), preferred_element_type=jnp.float32)
         + b1)
    h = h * jax.nn.sigmoid(h)
    ref_bf16 = (jnp.dot(h.astype(jnp.bfloat16), w2.astype(jnp.bfloat16),
                        preferred_element_type=jnp.float32) + b2)
    assert jnp.allclose(out_f32, ref_bf16, atol=1e-2, rtol=1e-2), \
        float(jnp.max(jnp.abs(out_f32 - ref_bf16)))

    # Reference 2: full-f32 PyTorch-equivalent math (loose check: bf16 rounding).
    emb = jnp.concatenate([jnp.cos(args), jnp.sin(args)], axis=-1)
    h32 = emb @ w1 + b1
    h32 = h32 * jax.nn.sigmoid(h32)
    ref_f32 = h32 @ w2 + b2
    assert jnp.allclose(out_f32, ref_f32, atol=3e-2, rtol=3e-2), \
        float(jnp.max(jnp.abs(out_f32 - ref_f32)))

    print("KERNEL_OK")
</pallas_src>

<mosaic_0001>
module attributes {stable_mosaic.version = 11 : i64} {
  func.func @timestep_embedder_kernel(%arg0: i32, %arg1: memref<32x1xf32, #tpu.memory_space<vmem>>, %arg2: memref<1x128xf32, #tpu.memory_space<vmem>>, %arg3: memref<256x256xbf16, #tpu.memory_space<vmem>>, %arg4: memref<1x256xf32, #tpu.memory_space<vmem>>, %arg5: memref<256x256xbf16, #tpu.memory_space<vmem>>, %arg6: memref<1x256xf32, #tpu.memory_space<vmem>>, %arg7: memref<32x256xbf16, #tpu.memory_space<vmem>>) attributes {dimension_semantics = [#tpu.dimension_semantics<parallel>], iteration_bounds = array<i64: 2>, scalar_prefetch = 0 : i64, scratch_operands = 0 : i64, tpu.core_type = #tpu.core_type<tc>, window_params = [{transform_indices = @transform_0, window_bounds = array<i64: 32, 1>}, {pipeline_mode = #tpu.pipeline_mode<synchronous>, transform_indices = @transform_1, window_bounds = array<i64: 1, 128>}, {pipeline_mode = #tpu.pipeline_mode<synchronous>, transform_indices = @transform_2, window_bounds = array<i64: 256, 256>}, {pipeline_mode = #tpu.pipeline_mode<synchronous>, transform_indices = @transform_3, window_bounds = array<i64: 1, 256>}, {pipeline_mode = #tpu.pipeline_mode<synchronous>, transform_indices = @transform_4, window_bounds = array<i64: 256, 256>}, {pipeline_mode = #tpu.pipeline_mode<synchronous>, transform_indices = @transform_5, window_bounds = array<i64: 1, 256>}, {transform_indices = @transform_6, window_bounds = array<i64: 32, 256>}]} {
    %c0 = arith.constant 0 : index
    %c0_0 = arith.constant 0 : index
    %0 = vector.load %arg1[%c0, %c0_0] : memref<32x1xf32, #tpu.memory_space<vmem>>, vector<32x1xf32>
    %c0_1 = arith.constant 0 : index
    %c0_2 = arith.constant 0 : index
    %1 = vector.load %arg2[%c0_1, %c0_2] : memref<1x128xf32, #tpu.memory_space<vmem>>, vector<1x128xf32>
    %2 = vector.broadcast %0 : vector<32x1xf32> to vector<32x128xf32>
    %3 = vector.broadcast %1 : vector<1x128xf32> to vector<32x128xf32>
    %4 = arith.mulf %2, %3 : vector<32x128xf32>
    %5 = math.cos %4 : vector<32x128xf32>
    %6 = math.sin %4 : vector<32x128xf32>
    %7 = tpu.concatenate %5, %6 in 1 : vector<32x128xf32>, vector<32x128xf32> -> vector<32x256xf32>
    %8 = arith.truncf %7 : vector<32x256xf32> to vector<32x256xbf16>
    %c0_3 = arith.constant 0 : index
    %c0_4 = arith.constant 0 : index
    %9 = vector.load %arg3[%c0_3, %c0_4] : memref<256x256xbf16, #tpu.memory_space<vmem>>, vector<256x256xbf16>
    %cst = arith.constant dense<0.000000e+00> : vector<32x256xf32>
    %10 = tpu.matmul %8, %9, %cst {dimension_numbers = #tpu.dot_dimension_numbers<[1], [0], [0], [1], [0, 0, 1, 1], [], []>} : vector<32x256xbf16>, vector<256x256xbf16>, vector<32x256xf32> -> vector<32x256xf32>
    %c0_5 = arith.constant 0 : index
    %c0_6 = arith.constant 0 : index
    %11 = vector.load %arg4[%c0_5, %c0_6] : memref<1x256xf32, #tpu.memory_space<vmem>>, vector<1x256xf32>
    %12 = vector.broadcast %11 : vector<1x256xf32> to vector<32x256xf32>
    %13 = arith.addf %10, %12 : vector<32x256xf32>
    %cst_7 = arith.constant 0.000000e+00 : f32
    %14 = vector.broadcast %cst_7 : f32 to vector<32x256xf32>
    %15 = arith.subf %14, %13 : vector<32x256xf32>
    %16 = math.exp %15 : vector<32x256xf32>
    %cst_8 = arith.constant 1.000000e+00 : f32
    %17 = vector.broadcast %cst_8 : f32 to vector<32x256xf32>
    %18 = arith.addf %17, %16 : vector<32x256xf32>
    %19 = tpu.reciprocal %18 {approx = true} : vector<32x256xf32> -> vector<32x256xf32>
    %20 = arith.mulf %13, %19 : vector<32x256xf32>
    %21 = arith.truncf %20 : vector<32x256xf32> to vector<32x256xbf16>
    %c0_9 = arith.constant 0 : index
    %c0_10 = arith.constant 0 : index
    %22 = vector.load %arg5[%c0_9, %c0_10] : memref<256x256xbf16, #tpu.memory_space<vmem>>, vector<256x256xbf16>
    %cst_11 = arith.constant dense<0.000000e+00> : vector<32x256xf32>
    %23 = tpu.matmul %21, %22, %cst_11 {dimension_numbers = #tpu.dot_dimension_numbers<[1], [0], [0], [1], [0, 0, 1, 1], [], []>} : vector<32x256xbf16>, vector<256x256xbf16>, vector<32x256xf32> -> vector<32x256xf32>
    %c0_12 = arith.constant 0 : index
    %c0_13 = arith.constant 0 : index
    %24 = vector.load %arg6[%c0_12, %c0_13] : memref<1x256xf32, #tpu.memory_space<vmem>>, vector<1x256xf32>
    %25 = vector.broadcast %24 : vector<1x256xf32> to vector<32x256xf32>
    %26 = arith.addf %23, %25 : vector<32x256xf32>
    %27 = arith.truncf %26 : vector<32x256xf32> to vector<32x256xbf16>
    %c0_14 = arith.constant 0 : index
    %c0_15 = arith.constant 0 : index
    %28 = vector.load %arg7[%c0_14, %c0_15] : memref<32x256xbf16, #tpu.memory_space<vmem>>, vector<32x256xbf16>
    tpu.vector_store %arg7[%c0_14, %c0_15], %27 {strides = array<i32>} : memref<32x256xbf16, #tpu.memory_space<vmem>>, vector<32x256xbf16>,
    return
  }
  func.func @transform_0(%arg0: i32) -> (i32, i32) {
    %c0_i32 = arith.constant 0 : i32
    %c0_i32_0 = arith.constant 0 : i32
    return %arg0, %c0_i32 : i32, i32
  }
  func.func @transform_1(%arg0: i32) -> (i32, i32) {
    %c0_i32 = arith.constant 0 : i32
    %c0_i32_0 = arith.constant 0 : i32
    %c0_i32_1 = arith.constant 0 : i32
    return %c0_i32, %c0_i32_0 : i32, i32
  }
  func.func @transform_2(%arg0: i32) -> (i32, i32) {
    %c0_i32 = arith.constant 0 : i32
    %c0_i32_0 = arith.constant 0 : i32
    %c0_i32_1 = arith.constant 0 : i32
    return %c0_i32, %c0_i32_0 : i32, i32
  }
  func.func @transform_3(%arg0: i32) -> (i32, i32) {
    %c0_i32 = arith.constant 0 : i32
    %c0_i32_0 = arith.constant 0 : i32
    %c0_i32_1 = arith.constant 0 : i32
    return %c0_i32, %c0_i32_0 : i32, i32
  }
  func.func @transform_4(%arg0: i32) -> (i32, i32) {
    %c0_i32 = arith.constant 0 : i32
    %c0_i32_0 = arith.constant 0 : i32
    %c0_i32_1 = arith.constant 0 : i32
    return %c0_i32, %c0_i32_0 : i32, i32
  }
  func.func @transform_5(%arg0: i32) -> (i32, i32) {
    %c0_i32 = arith.constant 0 : i32
    %c0_i32_0 = arith.constant 0 : i32
    %c0_i32_1 = arith.constant 0 : i32
    return %c0_i32, %c0_i32_0 : i32, i32
  }
  func.func @transform_6(%arg0: i32) -> (i32, i32) {
    %c0_i32 = arith.constant 0 : i32
    %c0_i32_0 = arith.constant 0 : i32
    return %arg0, %c0_i32 : i32, i32
  }
}

</mosaic_0001>

<llo_original>
// kernel: tpu_custom_call.1
$region0: #{tpu_custom_call.1}
  #allocation0 [shape = 'u32[]', space=smem, size = 0x4, offset = 0x4, fixed_abs, tag = 'smem constant byte address 0x4 - core index']
  #allocation1 [shape = 'u32[144,128]{1,0:T(1,128)}', space=vmem, size = 0x12000, scoped, tag = 'internal scratch']
  %s0 = inlined_call_operand.vmem [shape: f32[64,1], index: 0, kind: input, shape index: {}]
  %s1 = inlined_call_operand.vmem [shape: f32[1,128], index: 1, kind: input, shape index: {}]
  %s2 = inlined_call_operand.hbm [shape: bf16[256,256], index: 2, kind: input, shape index: {}]
  %s3 = inlined_call_operand.vmem [shape: f32[1,256], index: 3, kind: input, shape index: {}]
  %s4 = inlined_call_operand.hbm [shape: bf16[256,256], index: 4, kind: input, shape index: {}]
  %s5 = inlined_call_operand.vmem [shape: f32[1,256], index: 5, kind: input, shape index: {}]
  %s6 = inlined_call_operand.hbm [shape: bf16[64,256], index: 6, kind: output, shape index: {}]
  %s7 = sld [smem:[#allocation0]]
  $region65: #{tpu_custom_call.1} parent=0
    _
  %s9 = ssub.s32 1, %s7
  %s10 = scalar_select 0, %s9, %s7
  $region1: #{tpu_custom_call.1} parent=0
    #allocation2 [shape = 'u8[131072]{0}', space=vmem, size = 0x20000, scoped, tag = 'input window, operand 2, single buffered']
    #allocation3 [shape = 's32[2]{0}', space=sflag, size = 0x8, scoped, tag = 'scoped memory for tpu_custom_call.1']
    #allocation4 [shape = 's32[2]{0}', space=sflag, size = 0x8, scoped, tag = 'scoped memory for tpu_custom_call.1']
    #allocation5 [shape = 'u8[131072]{0}', space=vmem, size = 0x20000, scoped, tag = 'input window, operand 4, single buffered']
    #allocation6 [shape = 's32[1]{0}', space=sflag, size = 0x4, scoped, tag = 'scoped memory for tpu_custom_call.1']
    #allocation7 [shape = 'u8[32768]{0}', space=vmem, size = 0x8000, scoped, tag = 'output window, operand 0']
    %11 = vsyncpa [#allocation3], 0
    %12 = vsyncpa [#allocation6], 0
    %13 = vsyncpa [#allocation4], 0
    %s14 = scalar_lea.sflag [#allocation4], 1
    %15 = vsyncpa %s14, 0
    loop: start=0, step=1, limit=4
    $region2: #{tpu_custom_call.1} parent=1 // loop_pre_header
      _
    $region3: #{tpu_custom_call.1} parent=1 // loop_header
      %s17 = sphi 0, %s21
      %p18 = scmp.ge.s32.totalorder %s17, 4
      %s27 = sphi 0, %s29
      %s30 = sphi 0, %s27
      %s31 = sphi 0, %s30
      %s47 = sphi 0, %s31
      %s51 = sphi 0, %s51
      %s53 = sphi 0, %s51
      %s54 = sphi 0, %s53
      %s68 = sphi 0, %s54
      %s72 = sphi 0, %s72
      %s74 = sphi 0, %s72
      %s75 = sphi 0, %s74
      %s89 = sphi 0, %s75
      %s93 = sphi 0, %s93
      %s95 = sphi 0, %s93
      %s96 = sphi 0, %s95
      %s110 = sphi 0, %s96
      %s114 = sphi 0, %s114
      %s116 = sphi 0, %s114
      %s117 = sphi 0, %s116
      %s131 = sphi 0, %s117
      %s135 = sphi 0, %s135
      %s137 = sphi 0, %s135
      %s138 = sphi 0, %s137
      %s152 = sphi 0, %s138
      %s158 = sphi 0, %s160
      %s161 = sphi 0, %s158
      %s162 = sphi 0, %s161
      %s178 = sphi 0, %s162
    $region4: #{tpu_custom_call.1} parent=1 // loop_header_branch
      %20 = sbr.rel (%p18) target = $region8
    $region5: #{tpu_custom_call.1} parent=1 // loop_body
      %s22 = ssub.s32 %s17, 1
      %s23 = ssub.s32 %s17, 2
      %s24 = sadd.s32 %s17, 1
      %s25 = ssub.s32 %s17, %s24
      %p26 = scmp.eq.s32.totalorder %s25, 0
      %s28 = sadd.s32 %s27, 1
      %s29 = scalar_select %p26, %s27, %s28
      %p32 = pneg %p26
      %p33 = scmp.eq.s32.totalorder %s17, 1
      %p34 = por %p32, %p33
      %p35 = scmp.ne.s32.totalorder %s27, %s30
      %p36 = scmp.eq.s32.totalorder %s17, 0
      %p37 = por %p35, %p36
      %p38 = scmp.ne.s32.totalorder %s27, %s30
      %p39 = scmp.eq.s32.totalorder %s22, 1
      %p40 = por %p38, %p39
      %p41 = scmp.ne.s32.totalorder %s30, %s31
      %p42 = scmp.eq.s32.totalorder %s22, 0
      %p43 = por %p41, %p42
      %p44 = scmp.ne.s32.totalorder %s30, %s31
      %p45 = scmp.eq.s32.totalorder %s23, 1
      %p46 = por %p44, %p45
      %p48 = scmp.ne.s32.totalorder %s31, %s47
      %p49 = scmp.eq.s32.totalorder %s23, 0
      %p50 = por %p48, %p49
      %s52 = sadd.s32 %s51, 1
      %p55 = scmp.eq.s32.totalorder %s17, 1
      %p56 = scmp.ne.s32.totalorder %s51, %s53
      %p57 = scmp.eq.s32.totalorder %s17, 0
      %p58 = por %p56, %p57
      %p59 = scmp.ne.s32.totalorder %s51, %s53
      %p60 = scmp.eq.s32.totalorder %s22, 1
      %p61 = por %p59, %p60
      %p62 = scmp.ne.s32.totalorder %s53, %s54
      %p63 = scmp.eq.s32.totalorder %s22, 0
      %p64 = por %p62, %p63
      %p65 = scmp.ne.s32.totalorder %s53, %s54
      %p66 = scmp.eq.s32.totalorder %s23, 1
      %p67 = por %p65, %p66
      %p69 = scmp.ne.s32.totalorder %s54, %s68
      %p70 = scmp.eq.s32.totalorder %s23, 0
      %p71 = por %p69, %p70
      %s73 = sadd.s32 %s72, 1
      %p76 = scmp.eq.s32.totalorder %s17, 1
      %p77 = scmp.ne.s32.totalorder %s72, %s74
      %p78 = scmp.eq.s32.totalorder %s17, 0
      %p79 = por %p77, %p78
      %p80 = scmp.ne.s32.totalorder %s72, %s74
      %p81 = scmp.eq.s32.totalorder %s22, 1
      %p82 = por %p80, %p81
      %p83 = scmp.ne.s32.totalorder %s74, %s75
      %p84 = scmp.eq.s32.totalorder %s22, 0
      %p85 = por %p83, %p84
      %p86 = scmp.ne.s32.totalorder %s74, %s75
      %p87 = scmp.eq.s32.totalorder %s23, 1
      %p88 = por %p86, %p87
      %p90 = scmp.ne.s32.totalorder %s75, %s89
      %p91 = scmp.eq.s32.totalorder %s23, 0
      %p92 = por %p90, %p91
      %s94 = sadd.s32 %s93, 1
      %p97 = scmp.eq.s32.totalorder %s17, 1
      %p98 = scmp.ne.s32.totalorder %s93, %s95
      %p99 = scmp.eq.s32.totalorder %s17, 0
      %p100 = por %p98, %p99
      %p101 = scmp.ne.s32.totalorder %s93, %s95
      %p102 = scmp.eq.s32.totalorder %s22, 1
      %p103 = por %p101, %p102
      %p104 = scmp.ne.s32.totalorder %s95, %s96
      %p105 = scmp.eq.s32.totalorder %s22, 0
      %p106 = por %p104, %p105
      %p107 = scmp.ne.s32.totalorder %s95, %s96
      %p108 = scmp.eq.s32.totalorder %s23, 1
      %p109 = por %p107, %p108
      %p111 = scmp.ne.s32.totalorder %s96, %s110
      %p112 = scmp.eq.s32.totalorder %s23, 0
      %p113 = por %p111, %p112
      %s115 = sadd.s32 %s114, 1
      %p118 = scmp.eq.s32.totalorder %s17, 1
      %p119 = scmp.ne.s32.totalorder %s114, %s116
      %p120 = scmp.eq.s32.totalorder %s17, 0
      %p121 = por %p119, %p120
      %p122 = scmp.ne.s32.totalorder %s114, %s116
      %p123 = scmp.eq.s32.totalorder %s22, 1
      %p124 = por %p122, %p123
      %p125 = scmp.ne.s32.totalorder %s116, %s117
      %p126 = scmp.eq.s32.totalorder %s22, 0
      %p127 = por %p125, %p126
      %p128 = scmp.ne.s32.totalorder %s116, %s117
      %p129 = scmp.eq.s32.totalorder %s23, 1
      %p130 = por %p128, %p129
      %p132 = scmp.ne.s32.totalorder %s117, %s131
      %p133 = scmp.eq.s32.totalorder %s23, 0
      %p134 = por %p132, %p133
      %s136 = sadd.s32 %s135, 1
      %p139 = scmp.eq.s32.totalorder %s17, 1
      %p140 = scmp.ne.s32.totalorder %s135, %s137
      %p141 = scmp.eq.s32.totalorder %s17, 0
      %p142 = por %p140, %p141
      %p143 = scmp.ne.s32.totalorder %s135, %s137
      %p144 = scmp.eq.s32.totalorder %s22, 1
      %p145 = por %p143, %p144
      %p146 = scmp.ne.s32.totalorder %s137, %s138
      %p147 = scmp.eq.s32.totalorder %s22, 0
      %p148 = por %p146, %p147
      %p149 = scmp.ne.s32.totalorder %s137, %s138
      %p150 = scmp.eq.s32.totalorder %s23, 1
      %p151 = por %p149, %p150
      %p153 = scmp.ne.s32.totalorder %s138, %s152
      %p154 = scmp.eq.s32.totalorder %s23, 0
      %p155 = por %p153, %p154
      %s156 = ssub.s32 %s17, %s24
      %p157 = scmp.eq.s32.totalorder %s156, 0
      %s159 = sadd.s32 %s158, 1
      %s160 = scalar_select %p157, %s158, %s159
      %p163 = pneg %p157
      %p164 = scmp.eq.s32.totalorder %s17, 1
      %p165 = por %p163, %p164
      %p166 = scmp.ne.s32.totalorder %s158, %s161
      %p167 = scmp.eq.s32.totalorder %s17, 0
      %p168 = por %p166, %p167
      %p169 = scmp.ne.s32.totalorder %s158, %s161
      %p170 = scmp.eq.s32.totalorder %s22, 1
      %p171 = por %p169, %p170
      %p172 = scmp.ne.s32.totalorder %s161, %s162
      %p173 = scmp.eq.s32.totalorder %s22, 0
      %p174 = por %p172, %p173
      %p175 = scmp.ne.s32.totalorder %s161, %s162
      %p176 = scmp.eq.s32.totalorder %s23, 1
      %p177 = por %p175, %p176
      %p179 = scmp.ne.s32.totalorder %s162, %s178
      %p180 = scmp.eq.s32.totalorder %s23, 0
      %p181 = por %p179, %p180
      %p182 = scmp.le.s32.totalorder 1, %s17
      %p183 = scmp.lt.s32.totalorder %s17, 3
      %p184 = pnand %p182, %p183
      %p185 = pneg %p184
      // Predicated region
      $region9: #{tpu_custom_call.1} parent=5 // pred_check
        _
      $region10: #{tpu_custom_call.1} parent=5 // pred_check_branch
        %187 = sbr.rel (%p184) target = $region12
      $region11: #{tpu_custom_call.1} parent=5 // pred_region
        %s188 = ssub.s32 %s17, 1
        // Predicated region
        $region13: #{tpu_custom_call.1} parent=11 // pred_check
          %p189 = pneg %p64
        $region14: #{tpu_custom_call.1} parent=11 // pred_check_branch
          %191 = sbr.rel (%p189) target = $region16
        $region15: #{tpu_custom_call.1} parent=11 // pred_region
          _
        $region16: #{tpu_custom_call.1} parent=11 // pred_fallthru
          _
        // Predicated region
        $region17: #{tpu_custom_call.1} parent=11 // pred_check
          %p192 = pneg %p85
        $region18: #{tpu_custom_call.1} parent=11 // pred_check_branch
          %194 = sbr.rel (%p192) target = $region20
        $region19: #{tpu_custom_call.1} parent=11 // pred_region
          %s196 = ssub.s32 4096, 4096
          %197 = vsyncadd [#allocation3], %s196
          %s198 = sshll.u32 [#allocation2], 4
          %s199 = int_to_ptr.vmem [resolvable:$true] %s198
          %204 = dma.hbm_to_vmem [thread:$0]  %s2, 4096, %s199, [#allocation3], 128, 128, 8
        $region20: #{tpu_custom_call.1} parent=11 // pred_fallthru
          _
        // Predicated region
        $region21: #{tpu_custom_call.1} parent=11 // pred_check
          %p205 = pneg %p106
        $region22: #{tpu_custom_call.1} parent=11 // pred_check_branch
          %207 = sbr.rel (%p205) target = $region24
        $region23: #{tpu_custom_call.1} parent=11 // pred_region
          _
        $region24: #{tpu_custom_call.1} parent=11 // pred_fallthru
          _
        // Predicated region
        $region25: #{tpu_custom_call.1} parent=11 // pred_check
          %p208 = pneg %p127
        $region26: #{tpu_custom_call.1} parent=11 // pred_check_branch
          %210 = sbr.rel (%p208) target = $region28
        $region27: #{tpu_custom_call.1} parent=11 // pred_region
          %s212 = ssub.s32 4096, 4096
          %213 = vsyncadd [#allocation6], %s212
          %s214 = sshll.u32 [#allocation5], 4
          %s215 = int_to_ptr.vmem [resolvable:$true] %s214
          %220 = dma.hbm_to_vmem [thread:$0]  %s4, 4096, %s215, [#allocation6], 128, 128, 8
        $region28: #{tpu_custom_call.1} parent=11 // pred_fallthru
          _
        // Predicated region
        $region29: #{tpu_custom_call.1} parent=11 // pred_check
          %p221 = pneg %p148
        $region30: #{tpu_custom_call.1} parent=11 // pred_check_branch
          %223 = sbr.rel (%p221) target = $region32
        $region31: #{tpu_custom_call.1} parent=11 // pred_region
          _
        $region32: #{tpu_custom_call.1} parent=11 // pred_fallthru
          _
      $region12: #{tpu_custom_call.1} parent=5 // pred_fallthru
        _
      %p224 = scmp.lt.s32.totalorder %s17, 2
      // Predicated region
      $region33: #{tpu_custom_call.1} parent=5 // pred_check
        %p225 = pneg %p224
      $region34: #{tpu_custom_call.1} parent=5 // pred_check_branch
        %227 = sbr.rel (%p225) target = $region36
      $region35: #{tpu_custom_call.1} parent=5 // pred_region
        // Predicated region
        $region37: #{tpu_custom_call.1} parent=35 // pred_check
          %p228 = pneg %p37
        $region38: #{tpu_custom_call.1} parent=35 // pred_check_branch
          %230 = sbr.rel (%p228) target = $region40
        $region39: #{tpu_custom_call.1} parent=35 // pred_region
          %s231 = smul.u32 4, %s17
          %p232 = scmp.lt.s32.totalorder %s231, 7
          %s233 = scalar_select %p232, %s231, 7
          %s234 = smul.addr %s233, 8
          %s235 = scalar_lea.vmem %s0, %s234
          %s236 = smul.u32 4, %s17
        $region40: #{tpu_custom_call.1} parent=35 // pred_fallthru
          _
      $region36: #{tpu_custom_call.1} parent=5 // pred_fallthru
        _
      %p237 = scmp.le.s32.totalorder 1, %s17
      %p238 = scmp.lt.s32.totalorder %s17, 3
      %p239 = pnand %p237, %p238
      %p240 = pneg %p239
      // Predicated region
      $region41: #{tpu_custom_call.1} parent=5 // pred_check
        _
      $region42: #{tpu_custom_call.1} parent=5 // pred_check_branch
        %242 = sbr.rel (%p239) target = $region44
      $region43: #{tpu_custom_call.1} parent=5 // pred_region
        %s243 = ssub.s32 %s17, 1
        // Predicated region
        $region45: #{tpu_custom_call.1} parent=43 // pred_check
          %p244 = pneg %p85
        $region46: #{tpu_custom_call.1} parent=43 // pred_check_branch
          %246 = sbr.rel (%p244) target = $region48
        $region47: #{tpu_custom_call.1} parent=43 // pred_region
          %247 = dma.done [#allocation3], 4096
        $region48: #{tpu_custom_call.1} parent=43 // pred_fallthru
          _
        // Predicated region
        $region49: #{tpu_custom_call.1} parent=43 // pred_check
          %p248 = pneg %p127
        $region50: #{tpu_custom_call.1} parent=43 // pred_check_branch
          %250 = sbr.rel (%p248) target = $region52
        $region51: #{tpu_custom_call.1} parent=43 // pred_region
          %251 = dma.done [#allocation6], 4096
        $region52: #{tpu_custom_call.1} parent=43 // pred_fallthru
          _
        %s252 = smul.u32 4, %s22
        %p253 = scmp.lt.s32.totalorder %s252, 7
        %s254 = scalar_select %p253, %s252, 7
        %s255 = smul.addr %s254, 8
        %s256 = scalar_lea.vmem %s0, %s255
        %p257 = pneg %p43
        %p258 = pneg %p40
        %p259 = pneg %p64
        %p260 = pneg %p61
        %p261 = pneg %p85
        %p262 = pneg %p82
        %p263 = pneg %p106
        %p264 = pneg %p103
        %p265 = pneg %p127
        %p266 = pneg %p124
        %p267 = pneg %p148
        %p268 = pneg %p145
        %p269 = pneg %p174
        %p270 = pneg %p171
        %s271 = sand.u32 %s161, 1
        %s272 = scalar_lea.sflag [#allocation4], %s271
        %s273 = sand.u32 %s161, 1
        %s274 = smul.addr %s273, 32
        %s275 = scalar_lea.vmem [#allocation7], %s274
        %s276 = smul.u32 4, %s22
        %p277 = scmp.lt.s32.totalorder %s276, 7
        %s278 = scalar_select %p277, %s276, 7
        %s279 = smul.addr %s278, 8
        %s280 = scalar_lea.vmem %s0, %s279
        %s281 = smul.u32 4, %s22
        %s282 = smul.u32 4, %s22
        %v283 = vld [vmem:[%s280] sm:$0xff]
        %v284 = vld [vmem:[%s280 + $0x8] sm:$0xff]
        %v285 = vld [vmem:[%s280 + $0x10] sm:$0xff]
        %v286 = vld [vmem:[%s280 + $0x18] sm:$0xff]
        %v287 = vld [vmem:[%s1] sm:$0x1]
        %289 = vset.pattern.permute.xlu0 0
        %290 = vperm.xlu0 %289, %v283
        %v291 = vpop.permute.xlu0 %290
        %294 = vset.pattern.permute.xlu0 0
        %295 = vperm.xlu0 %294, %v284
        %v296 = vpop.permute.xlu0 %295
        %299 = vset.pattern.permute.xlu0 0
        %300 = vperm.xlu0 %299, %v285
        %v301 = vpop.permute.xlu0 %300
        %304 = vset.pattern.permute.xlu0 0
        %305 = vperm.xlu0 %304, %v286
        %v306 = vpop.permute.xlu0 %305
        %v309 = vlaneseq
        %v310 = vshrl.u32 %v309, 7
        %v311 = vsub.s32 0, %v310
        %v312 = vrot.slane %v287, %v311
        %v314 = vmul.f32 %v291, %v312
        %v315 = vmul.f32 %v296, %v312
        %v316 = vmul.f32 %v301, %v312
        %v317 = vmul.f32 %v306, %v312
        %v318 = vand.u32 2147483647, %v314
        %vm319 = vcmp.le.f32.partialorder %v318, 0.7853982
        %vm320 = vcmp.lt.s32.totalorder %v314, 0
        %v321 = vand.u32 %v314, 2139095040
        %v322 = vshrl.u32 %v321, 23
        %v323 = vsub.s32 %v322, 127
        %v324 = vand.u32 2147483647, %v314
        %v325 = vand.u32 %v324, 8388607
        %v326 = vor.u32 %v325, 8388608
        %v327 = vsub.s32 0, %v326
        %v328 = vadd.s32 %v323, 1
        %vm329 = vcmp.gt.s32.totalorder %v328, 0
        %v330 = vsel %vm329, %v328, 0
        %v331 = vshrl.u32 %v330, 5
        %v332 = vand.u32 %v330, 31
        %v333 = vsub.s32 32, %v332
        %v334 = vshrl.u32 683565275, %v333
        %v335 = vshll.u32 683565275, %v332
        %v336 = vshrl.u32 2475754826, %v333
        %v337 = vor.u32 %v335, %v336
        %v338 = vshll.u32 2475754826, %v332
        %v339 = vshrl.u32 2131351028, %v333
        %v340 = vor.u32 %v338, %v339
        %v341 = vshll.u32 2131351028, %v332
        %v342 = vshrl.u32 2102212464, %v333
        %v343 = vor.u32 %v341, %v342
        %v344 = vshll.u32 2102212464, %v332
        %v345 = vshrl.u32 920167782, %v333
        %v346 = vor.u32 %v344, %v345
        %v347 = vshll.u32 920167782, %v332
        %v348 = vshrl.u32 1326507024, %v333
        %v349 = vor.u32 %v347, %v348
        %vm350 = vcmp.lt.s32.totalorder %v331, 1
        %vm351 = vcmp.lt.s32.totalorder %v331, 2
        %vm352 = vcmp.lt.s32.totalorder %v331, 3
        %vm353 = vcmp.lt.s32.totalorder %v331, 4
        %v354 = vsel %vm350, %v334, %v337
        %v355 = vsel %vm353, %v343, 2102212464
        %v356 = vsel %vm352, %v340, %v355
        %v357 = vsel %vm351, %v354, %v356
        %v358 = vsel %vm350, %v337, %v340
        %v359 = vsel %vm353, %v346, 920167782
        %v360 = vsel %vm352, %v343, %v359
        %v361 = vsel %vm351, %v358, %v360
        %v362 = vsel %vm350, %v340, %v343
        %v363 = vsel %vm353, %v349, 1326507024
        %v364 = vsel %vm352, %v346, %v363
        %v365 = vsel %vm351, %v362, %v364
        %v366 = vshll.u32 %v326, 8
        %v367 = vmul.u32.u64.compose %v366, %v365
        %v368 = vextract.low.u32 %v367
        %v369 = vextract.high.u32 %v367
        %v370 = vmul.u32.u64.compose %v366, %v361
        %v371 = vextract.low.u32 %v370
        %v372 = vextract.high.u32 %v370
        %v373 = vmul.u32 %v366, %v357
        %v374 = vadd.s32 %v369, %v371
        %vm375 = vc.u32 %v369, %v371
        %v376 = vadd.s32 %v372, 1
        %v377 = vsel %vm375, %v376, %v372
        %v378 = vadd.s32 %v373, %v377
        %v379 = vadd.s32 %v378, 536870912
        %v380 = vshrl.u32 %v379, 30
        %v381 = vshll.u32 %v380, 30
        %v382 = vsub.s32 %v378, %v381
        %vm383 = vcmp.lt.s32.totalorder %v382, 0
        %v384 = vsub.s32 0, %v382
        %v385 = vsel %vm383, %v384, %v382
        %v386 = vclz %v385
        %v387 = vsub.s32 %v386, 2
        %vm388 = vcmp.gt.s32.totalorder 0, %v387
        %v389 = vsel %vm388, 0, %v387
        %v390 = vsub.s32 32, %v389
        %v391 = vshll.u32 %v382, %v389
        %v392 = vshrl.u32 %v374, %v390
        %v393 = vor.u32 %v391, %v392
        %v394 = vsub.s32 4294967266, %v389
        %v395 = vadd.s32 %v394, 127
        %v396 = vshll.u32 %v395, 23
        %v397 = vor.u32 4788187, %v396
        %v398 = vand.u32 2147483647, %v397
        %v400 = vcvt.s32.f32 %v393
        %v401 = vmul.f32 %v400, %v398
        %v402 = vxor.u32 %v401, 2147483648
        %v403 = vsel %vm320, %v402, %v401
        %v404 = vsub.s32 4, %v380
        %v405 = vsel %vm320, %v404, %v380
        %v406 = vsel %vm319, %v314, %v403
        %v407 = vsel %vm319, 0, %v405
        %v408 = vcosq.f32.pop %v406
        %v409 = vsinq.f32.pop %v406
        %vm410 = vweird.f32 %v314
        %v411 = vand.u32 %v407, 3
        %vm412 = vcmp.lt.s32.totalorder %v411, 2
        %vm413 = vcmp.eq.s32.totalorder %v411, 0
        %v414 = vxor.u32 %v409, 2147483648
        %v415 = vsel %vm413, %v408, %v414
        %vm416 = vcmp.eq.s32.totalorder %v411, 2
        %v417 = vxor.u32 %v408, 2147483648
        %v418 = vsel %vm416, %v417, %v409
        %v419 = vsel %vm412, %v415, %v418
        %v420 = vsel %vm410, nan, %v419
        %v421 = vand.u32 2147483647, %v315
        %vm422 = vcmp.le.f32.partialorder %v421, 0.7853982
        %vm423 = vcmp.lt.s32.totalorder %v315, 0
        %v424 = vand.u32 %v315, 2139095040
        %v425 = vshrl.u32 %v424, 23
        %v426 = vsub.s32 %v425, 127
        %v427 = vand.u32 2147483647, %v315
        %v428 = vand.u32 %v427, 8388607
        %v429 = vor.u32 %v428, 8388608
        %v430 = vsub.s32 0, %v429
        %v431 = vadd.s32 %v426, 1
        %vm432 = vcmp.gt.s32.totalorder %v431, 0
        %v433 = vsel %vm432, %v431, 0
        %v434 = vshrl.u32 %v433, 5
        %v435 = vand.u32 %v433, 31
        %v436 = vsub.s32 32, %v435
        %v437 = vshrl.u32 683565275, %v436
        %v438 = vshll.u32 683565275, %v435
        %v439 = vshrl.u32 2475754826, %v436
        %v440 = vor.u32 %v438, %v439
        %v441 = vshll.u32 2475754826, %v435
        %v442 = vshrl.u32 2131351028, %v436
        %v443 = vor.u32 %v441, %v442
        %v444 = vshll.u32 2131351028, %v435
        %v445 = vshrl.u32 2102212464, %v436
        %v446 = vor.u32 %v444, %v445
        %v447 = vshll.u32 2102212464, %v435
        %v448 = vshrl.u32 920167782, %v436
        %v449 = vor.u32 %v447, %v448
        %v450 = vshll.u32 920167782, %v435
        %v451 = vshrl.u32 1326507024, %v436
        %v452 = vor.u32 %v450, %v451
        %vm453 = vcmp.lt.s32.totalorder %v434, 1
        %vm454 = vcmp.lt.s32.totalorder %v434, 2
        %vm455 = vcmp.lt.s32.totalorder %v434, 3
        %vm456 = vcmp.lt.s32.totalorder %v434, 4
        %v457 = vsel %vm453, %v437, %v440
        %v458 = vsel %vm456, %v446, 2102212464
        %v459 = vsel %vm455, %v443, %v458
        %v460 = vsel %vm454, %v457, %v459
        %v461 = vsel %vm453, %v440, %v443
        %v462 = vsel %vm456, %v449, 920167782
        %v463 = vsel %vm455, %v446, %v462
        %v464 = vsel %vm454, %v461, %v463
        %v465 = vsel %vm453, %v443, %v446
        %v466 = vsel %vm456, %v452, 1326507024
        %v467 = vsel %vm455, %v449, %v466
        %v468 = vsel %vm454, %v465, %v467
        %v469 = vshll.u32 %v429, 8
        %v470 = vmul.u32.u64.compose %v469, %v468
        %v471 = vextract.low.u32 %v470
        %v472 = vextract.high.u32 %v470
        %v473 = vmul.u32.u64.compose %v469, %v464
        %v474 = vextract.low.u32 %v473
        %v475 = vextract.high.u32 %v473
        %v476 = vmul.u32 %v469, %v460
        %v477 = vadd.s32 %v472, %v474
        %vm478 = vc.u32 %v472, %v474
        %v479 = vadd.s32 %v475, 1
        %v480 = vsel %vm478, %v479, %v475
        %v481 = vadd.s32 %v476, %v480
        %v482 = vadd.s32 %v481, 536870912
        %v483 = vshrl.u32 %v482, 30
        %v484 = vshll.u32 %v483, 30
        %v485 = vsub.s32 %v481, %v484
        %vm486 = vcmp.lt.s32.totalorder %v485, 0
        %v487 = vsub.s32 0, %v485
        %v488 = vsel %vm486, %v487, %v485
        %v489 = vclz %v488
        %v490 = vsub.s32 %v489, 2
        %vm491 = vcmp.gt.s32.totalorder 0, %v490
        %v492 = vsel %vm491, 0, %v490
        %v493 = vsub.s32 32, %v492
        %v494 = vshll.u32 %v485, %v492
        %v495 = vshrl.u32 %v477, %v493
        %v496 = vor.u32 %v494, %v495
        %v497 = vsub.s32 4294967266, %v492
        %v498 = vadd.s32 %v497, 127
        %v499 = vshll.u32 %v498, 23
        %v500 = vor.u32 4788187, %v499
        %v501 = vand.u32 2147483647, %v500
        %v503 = vcvt.s32.f32 %v496
        %v504 = vmul.f32 %v503, %v501
        %v505 = vxor.u32 %v504, 2147483648
        %v506 = vsel %vm423, %v505, %v504
        %v507 = vsub.s32 4, %v483
        %v508 = vsel %vm423, %v507, %v483
        %v509 = vsel %vm422, %v315, %v506
        %v510 = vsel %vm422, 0, %v508
        %v511 = vcosq.f32.pop %v509
        %v512 = vsinq.f32.pop %v509
        %vm513 = vweird.f32 %v315
        %v514 = vand.u32 %v510, 3
        %vm515 = vcmp.lt.s32.totalorder %v514, 2
        %vm516 = vcmp.eq.s32.totalorder %v514, 0
        %v517 = vxor.u32 %v512, 2147483648
        %v518 = vsel %vm516, %v511, %v517
        %vm519 = vcmp.eq.s32.totalorder %v514, 2
        %v520 = vxor.u32 %v511, 2147483648
        %v521 = vsel %vm519, %v520, %v512
        %v522 = vsel %vm515, %v518, %v521
        %v523 = vsel %vm513, nan, %v522
        %v524 = vand.u32 2147483647, %v316
        %vm525 = vcmp.le.f32.partialorder %v524, 0.7853982
        %vm526 = vcmp.lt.s32.totalorder %v316, 0
        %v527 = vand.u32 %v316, 2139095040
        %v528 = vshrl.u32 %v527, 23
        %v529 = vsub.s32 %v528, 127
        %v530 = vand.u32 2147483647, %v316
        %v531 = vand.u32 %v530, 8388607
        %v532 = vor.u32 %v531, 8388608
        %v533 = vsub.s32 0, %v532
        %v534 = vadd.s32 %v529, 1
        %vm535 = vcmp.gt.s32.totalorder %v534, 0
        %v536 = vsel %vm535, %v534, 0
        %v537 = vshrl.u32 %v536, 5
        %v538 = vand.u32 %v536, 31
        %v539 = vsub.s32 32, %v538
        %v540 = vshrl.u32 683565275, %v539
        %v541 = vshll.u32 683565275, %v538
        %v542 = vshrl.u32 2475754826, %v539
        %v543 = vor.u32 %v541, %v542
        %v544 = vshll.u32 2475754826, %v538
        %v545 = vshrl.u32 2131351028, %v539
        %v546 = vor.u32 %v544, %v545
        %v547 = vshll.u32 2131351028, %v538
        %v548 = vshrl.u32 2102212464, %v539
        %v549 = vor.u32 %v547, %v548
        %v550 = vshll.u32 2102212464, %v538
        %v551 = vshrl.u32 920167782, %v539
        %v552 = vor.u32 %v550, %v551
        %v553 = vshll.u32 920167782, %v538
        %v554 = vshrl.u32 1326507024, %v539
        %v555 = vor.u32 %v553, %v554
        %vm556 = vcmp.lt.s32.totalorder %v537, 1
        %vm557 = vcmp.lt.s32.totalorder %v537, 2
        %vm558 = vcmp.lt.s32.totalorder %v537, 3
        %vm559 = vcmp.lt.s32.totalorder %v537, 4
        %v560 = vsel %vm556, %v540, %v543
        %v561 = vsel %vm559, %v549, 2102212464
        %v562 = vsel %vm558, %v546, %v561
        %v563 = vsel %vm557, %v560, %v562
        %v564 = vsel %vm556, %v543, %v546
        %v565 = vsel %vm559, %v552, 920167782
        %v566 = vsel %vm558, %v549, %v565
        %v567 = vsel %vm557, %v564, %v566
        %v568 = vsel %vm556, %v546, %v549
        %v569 = vsel %vm559, %v555, 1326507024
        %v570 = vsel %vm558, %v552, %v569
        %v571 = vsel %vm557, %v568, %v570
        %v572 = vshll.u32 %v532, 8
        %v573 = vmul.u32.u64.compose %v572, %v571
        %v574 = vextract.low.u32 %v573
        %v575 = vextract.high.u32 %v573
        %v576 = vmul.u32.u64.compose %v572, %v567
        %v577 = vextract.low.u32 %v576
        %v578 = vextract.high.u32 %v576
        %v579 = vmul.u32 %v572, %v563
        %v580 = vadd.s32 %v575, %v577
        %vm581 = vc.u32 %v575, %v577
        %v582 = vadd.s32 %v578, 1
        %v583 = vsel %vm581, %v582, %v578
        %v584 = vadd.s32 %v579, %v583
        %v585 = vadd.s32 %v584, 536870912
        %v586 = vshrl.u32 %v585, 30
        %v587 = vshll.u32 %v586, 30
        %v588 = vsub.s32 %v584, %v587
        %vm589 = vcmp.lt.s32.totalorder %v588, 0
        %v590 = vsub.s32 0, %v588
        %v591 = vsel %vm589, %v590, %v588
        %v592 = vclz %v591
        %v593 = vsub.s32 %v592, 2
        %vm594 = vcmp.gt.s32.totalorder 0, %v593
        %v595 = vsel %vm594, 0, %v593
        %v596 = vsub.s32 32, %v595
        %v597 = vshll.u32 %v588, %v595
        %v598 = vshrl.u32 %v580, %v596
        %v599 = vor.u32 %v597, %v598
        %v600 = vsub.s32 4294967266, %v595
        %v601 = vadd.s32 %v600, 127
        %v602 = vshll.u32 %v601, 23
        %v603 = vor.u32 4788187, %v602
        %v604 = vand.u32 2147483647, %v603
        %v606 = vcvt.s32.f32 %v599
        %v607 = vmul.f32 %v606, %v604
        %v608 = vxor.u32 %v607, 2147483648
        %v609 = vsel %vm526, %v608, %v607
        %v610 = vsub.s32 4, %v586
        %v611 = vsel %vm526, %v610, %v586
        %v612 = vsel %vm525, %v316, %v609
        %v613 = vsel %vm525, 0, %v611
        %v614 = vcosq.f32.pop %v612
        %v615 = vsinq.f32.pop %v612
        %vm616 = vweird.f32 %v316
        %v617 = vand.u32 %v613, 3
        %vm618 = vcmp.lt.s32.totalorder %v617, 2
        %vm619 = vcmp.eq.s32.totalorder %v617, 0
        %v620 = vxor.u32 %v615, 2147483648
        %v621 = vsel %vm619, %v614, %v620
        %vm622 = vcmp.eq.s32.totalorder %v617, 2
        %v623 = vxor.u32 %v614, 2147483648
        %v624 = vsel %vm622, %v623, %v615
        %v625 = vsel %vm618, %v621, %v624
        %v626 = vsel %vm616, nan, %v625
        %v627 = vand.u32 2147483647, %v317
        %vm628 = vcmp.le.f32.partialorder %v627, 0.7853982
        %vm629 = vcmp.lt.s32.totalorder %v317, 0
        %v630 = vand.u32 %v317, 2139095040
        %v631 = vshrl.u32 %v630, 23
        %v632 = vsub.s32 %v631, 127
        %v633 = vand.u32 2147483647, %v317
        %v634 = vand.u32 %v633, 8388607
        %v635 = vor.u32 %v634, 8388608
        %v636 = vsub.s32 0, %v635
        %v637 = vadd.s32 %v632, 1
        %vm638 = vcmp.gt.s32.totalorder %v637, 0
        %v639 = vsel %vm638, %v637, 0
        %v640 = vshrl.u32 %v639, 5
        %v641 = vand.u32 %v639, 31
        %v642 = vsub.s32 32, %v641
        %v643 = vshrl.u32 683565275, %v642
        %v644 = vshll.u32 683565275, %v641
        %v645 = vshrl.u32 2475754826, %v642
        %v646 = vor.u32 %v644, %v645
        %v647 = vshll.u32 2475754826, %v641
        %v648 = vshrl.u32 2131351028, %v642
        %v649 = vor.u32 %v647, %v648
        %v650 = vshll.u32 2131351028, %v641
        %v651 = vshrl.u32 2102212464, %v642
        %v652 = vor.u32 %v650, %v651
        %v653 = vshll.u32 2102212464, %v641
        %v654 = vshrl.u32 920167782, %v642
        %v655 = vor.u32 %v653, %v654
        %v656 = vshll.u32 920167782, %v641
        %v657 = vshrl.u32 1326507024, %v642
        %v658 = vor.u32 %v656, %v657
        %vm659 = vcmp.lt.s32.totalorder %v640, 1
        %vm660 = vcmp.lt.s32.totalorder %v640, 2
        %vm661 = vcmp.lt.s32.totalorder %v640, 3
        %vm662 = vcmp.lt.s32.totalorder %v640, 4
        %v663 = vsel %vm659, %v643, %v646
        %v664 = vsel %vm662, %v652, 2102212464
        %v665 = vsel %vm661, %v649, %v664
        %v666 = vsel %vm660, %v663, %v665
        %v667 = vsel %vm659, %v646, %v649
        %v668 = vsel %vm662, %v655, 920167782
        %v669 = vsel %vm661, %v652, %v668
        %v670 = vsel %vm660, %v667, %v669
        %v671 = vsel %vm659, %v649, %v652
        %v672 = vsel %vm662, %v658, 1326507024
        %v673 = vsel %vm661, %v655, %v672
        %v674 = vsel %vm660, %v671, %v673
        %v675 = vshll.u32 %v635, 8
        %v676 = vmul.u32.u64.compose %v675, %v674
        %v677 = vextract.low.u32 %v676
        %v678 = vextract.high.u32 %v676
        %v679 = vmul.u32.u64.compose %v675, %v670
        %v680 = vextract.low.u32 %v679
        %v681 = vextract.high.u32 %v679
        %v682 = vmul.u32 %v675, %v666
        %v683 = vadd.s32 %v678, %v680
        %vm684 = vc.u32 %v678, %v680
        %v685 = vadd.s32 %v681, 1
        %v686 = vsel %vm684, %v685, %v681
        %v687 = vadd.s32 %v682, %v686
        %v688 = vadd.s32 %v687, 536870912
        %v689 = vshrl.u32 %v688, 30
        %v690 = vshll.u32 %v689, 30
        %v691 = vsub.s32 %v687, %v690
        %vm692 = vcmp.lt.s32.totalorder %v691, 0
        %v693 = vsub.s32 0, %v691
        %v694 = vsel %vm692, %v693, %v691
        %v695 = vclz %v694
        %v696 = vsub.s32 %v695, 2
        %vm697 = vcmp.gt.s32.totalorder 0, %v696
        %v698 = vsel %vm697, 0, %v696
        %v699 = vsub.s32 32, %v698
        %v700 = vshll.u32 %v691, %v698
        %v701 = vshrl.u32 %v683, %v699
        %v702 = vor.u32 %v700, %v701
        %v703 = vsub.s32 4294967266, %v698
        %v704 = vadd.s32 %v703, 127
        %v705 = vshll.u32 %v704, 23
        %v706 = vor.u32 4788187, %v705
        %v707 = vand.u32 2147483647, %v706
        %v709 = vcvt.s32.f32 %v702
        %v710 = vmul.f32 %v709, %v707
        %v711 = vxor.u32 %v710, 2147483648
        %v712 = vsel %vm629, %v711, %v710
        %v713 = vsub.s32 4, %v689
        %v714 = vsel %vm629, %v713, %v689
        %v715 = vsel %vm628, %v317, %v712
        %v716 = vsel %vm628, 0, %v714
        %v717 = vcosq.f32.pop %v715
        %v718 = vsinq.f32.pop %v715
        %vm719 = vweird.f32 %v317
        %v720 = vand.u32 %v716, 3
        %vm721 = vcmp.lt.s32.totalorder %v720, 2
        %vm722 = vcmp.eq.s32.totalorder %v720, 0
        %v723 = vxor.u32 %v718, 2147483648
        %v724 = vsel %vm722, %v717, %v723
        %vm725 = vcmp.eq.s32.totalorder %v720, 2
        %v726 = vxor.u32 %v717, 2147483648
        %v727 = vsel %vm725, %v726, %v718
        %v728 = vsel %vm721, %v724, %v727
        %v729 = vsel %vm719, nan, %v728
        %v730 = vand.u32 2147483647, %v314
        %vm731 = vcmp.le.f32.partialorder %v730, 0.7853982
        %vm732 = vcmp.lt.s32.totalorder %v314, 0
        %v733 = vand.u32 %v314, 2139095040
        %v734 = vshrl.u32 %v733, 23
        %v735 = vsub.s32 %v734, 127
        %v736 = vand.u32 2147483647, %v314
        %v737 = vand.u32 %v736, 8388607
        %v738 = vor.u32 %v737, 8388608
        %v739 = vsub.s32 0, %v738
        %v740 = vadd.s32 %v735, 1
        %vm741 = vcmp.gt.s32.totalorder %v740, 0
        %v742 = vsel %vm741, %v740, 0
        %v743 = vshrl.u32 %v742, 5
        %v744 = vand.u32 %v742, 31
        %v745 = vsub.s32 32, %v744
        %v746 = vshrl.u32 683565275, %v745
        %v747 = vshll.u32 683565275, %v744
        %v748 = vshrl.u32 2475754826, %v745
        %v749 = vor.u32 %v747, %v748
        %v750 = vshll.u32 2475754826, %v744
        %v751 = vshrl.u32 2131351028, %v745
        %v752 = vor.u32 %v750, %v751
        %v753 = vshll.u32 2131351028, %v744
        %v754 = vshrl.u32 2102212464, %v745
        %v755 = vor.u32 %v753, %v754
        %v756 = vshll.u32 2102212464, %v744
        %v757 = vshrl.u32 920167782, %v745
        %v758 = vor.u32 %v756, %v757
        %v759 = vshll.u32 920167782, %v744
        %v760 = vshrl.u32 1326507024, %v745
        %v761 = vor.u32 %v759, %v760
        %vm762 = vcmp.lt.s32.totalorder %v743, 1
        %vm763 = vcmp.lt.s32.totalorder %v743, 2
        %vm764 = vcmp.lt.s32.totalorder %v743, 3
        %vm765 = vcmp.lt.s32.totalorder %v743, 4
        %v766 = vsel %vm762, %v746, %v749
        %v767 = vsel %vm765, %v755, 2102212464
        %v768 = vsel %vm764, %v752, %v767
        %v769 = vsel %vm763, %v766, %v768
        %v770 = vsel %vm762, %v749, %v752
        %v771 = vsel %vm765, %v758, 920167782
        %v772 = vsel %vm764, %v755, %v771
        %v773 = vsel %vm763, %v770, %v772
        %v774 = vsel %vm762, %v752, %v755
        %v775 = vsel %vm765, %v761, 1326507024
        %v776 = vsel %vm764, %v758, %v775
        %v777 = vsel %vm763, %v774, %v776
        %v778 = vshll.u32 %v738, 8
        %v779 = vmul.u32.u64.compose %v778, %v777
        %v780 = vextract.low.u32 %v779
        %v781 = vextract.high.u32 %v779
        %v782 = vmul.u32.u64.compose %v778, %v773
        %v783 = vextract.low.u32 %v782
        %v784 = vextract.high.u32 %v782
        %v785 = vmul.u32 %v778, %v769
        %v786 = vadd.s32 %v781, %v783
        %vm787 = vc.u32 %v781, %v783
        %v788 = vadd.s32 %v784, 1
        %v789 = vsel %vm787, %v788, %v784
        %v790 = vadd.s32 %v785, %v789
        %v791 = vadd.s32 %v790, 536870912
        %v792 = vshrl.u32 %v791, 30
        %v793 = vshll.u32 %v792, 30
        %v794 = vsub.s32 %v790, %v793
        %vm795 = vcmp.lt.s32.totalorder %v794, 0
        %v796 = vsub.s32 0, %v794
        %v797 = vsel %vm795, %v796, %v794
        %v798 = vclz %v797
        %v799 = vsub.s32 %v798, 2
        %vm800 = vcmp.gt.s32.totalorder 0, %v799
        %v801 = vsel %vm800, 0, %v799
        %v802 = vsub.s32 32, %v801
        %v803 = vshll.u32 %v794, %v801
        %v804 = vshrl.u32 %v786, %v802
        %v805 = vor.u32 %v803, %v804
        %v806 = vsub.s32 4294967266, %v801
        %v807 = vadd.s32 %v806, 127
        %v808 = vshll.u32 %v807, 23
        %v809 = vor.u32 4788187, %v808
        %v810 = vand.u32 2147483647, %v809
        %v812 = vcvt.s32.f32 %v805
        %v813 = vmul.f32 %v812, %v810
        %v814 = vxor.u32 %v813, 2147483648
        %v815 = vsel %vm732, %v814, %v813
        %v816 = vsub.s32 4, %v792
        %v817 = vsel %vm732, %v816, %v792
        %v818 = vsel %vm731, %v314, %v815
        %v819 = vsel %vm731, 0, %v817
        %v820 = vcosq.f32.pop %v818
        %v821 = vsinq.f32.pop %v818
        %vm822 = vweird.f32 %v314
        %v823 = vadd.s32 %v819, 3
        %v824 = vand.u32 %v823, 3
        %vm825 = vcmp.lt.s32.totalorder %v824, 2
        %vm826 = vcmp.eq.s32.totalorder %v824, 0
        %v827 = vxor.u32 %v821, 2147483648
        %v828 = vsel %vm826, %v820, %v827
        %vm829 = vcmp.eq.s32.totalorder %v824, 2
        %v830 = vxor.u32 %v820, 2147483648
        %v831 = vsel %vm829, %v830, %v821
        %v832 = vsel %vm825, %v828, %v831
        %v833 = vsel %vm822, nan, %v832
        %v834 = vand.u32 2147483647, %v315
        %vm835 = vcmp.le.f32.partialorder %v834, 0.7853982
        %vm836 = vcmp.lt.s32.totalorder %v315, 0
        %v837 = vand.u32 %v315, 2139095040
        %v838 = vshrl.u32 %v837, 23
        %v839 = vsub.s32 %v838, 127
        %v840 = vand.u32 2147483647, %v315
        %v841 = vand.u32 %v840, 8388607
        %v842 = vor.u32 %v841, 8388608
        %v843 = vsub.s32 0, %v842
        %v844 = vadd.s32 %v839, 1
        %vm845 = vcmp.gt.s32.totalorder %v844, 0
        %v846 = vsel %vm845, %v844, 0
        %v847 = vshrl.u32 %v846, 5
        %v848 = vand.u32 %v846, 31
        %v849 = vsub.s32 32, %v848
        %v850 = vshrl.u32 683565275, %v849
        %v851 = vshll.u32 683565275, %v848
        %v852 = vshrl.u32 2475754826, %v849
        %v853 = vor.u32 %v851, %v852
        %v854 = vshll.u32 2475754826, %v848
        %v855 = vshrl.u32 2131351028, %v849
        %v856 = vor.u32 %v854, %v855
        %v857 = vshll.u32 2131351028, %v848
        %v858 = vshrl.u32 2102212464, %v849
        %v859 = vor.u32 %v857, %v858
        %v860 = vshll.u32 2102212464, %v848
        %v861 = vshrl.u32 920167782, %v849
        %v862 = vor.u32 %v860, %v861
        %v863 = vshll.u32 920167782, %v848
        %v864 = vshrl.u32 1326507024, %v849
        %v865 = vor.u32 %v863, %v864
        %vm866 = vcmp.lt.s32.totalorder %v847, 1
        %vm867 = vcmp.lt.s32.totalorder %v847, 2
        %vm868 = vcmp.lt.s32.totalorder %v847, 3
        %vm869 = vcmp.lt.s32.totalorder %v847, 4
        %v870 = vsel %vm866, %v850, %v853
        %v871 = vsel %vm869, %v859, 2102212464
        %v872 = vsel %vm868, %v856, %v871
        %v873 = vsel %vm867, %v870, %v872
        %v874 = vsel %vm866, %v853, %v856
        %v875 = vsel %vm869, %v862, 920167782
        %v876 = vsel %vm868, %v859, %v875
        %v877 = vsel %vm867, %v874, %v876
        %v878 = vsel %vm866, %v856, %v859
        %v879 = vsel %vm869, %v865, 1326507024
        %v880 = vsel %vm868, %v862, %v879
        %v881 = vsel %vm867, %v878, %v880
        %v882 = vshll.u32 %v842, 8
        %v883 = vmul.u32.u64.compose %v882, %v881
        %v884 = vextract.low.u32 %v883
        %v885 = vextract.high.u32 %v883
        %v886 = vmul.u32.u64.compose %v882, %v877
        %v887 = vextract.low.u32 %v886
        %v888 = vextract.high.u32 %v886
        %v889 = vmul.u32 %v882, %v873
        %v890 = vadd.s32 %v885, %v887
        %vm891 = vc.u32 %v885, %v887
        %v892 = vadd.s32 %v888, 1
        %v893 = vsel %vm891, %v892, %v888
        %v894 = vadd.s32 %v889, %v893
        %v895 = vadd.s32 %v894, 536870912
        %v896 = vshrl.u32 %v895, 30
        %v897 = vshll.u32 %v896, 30
        %v898 = vsub.s32 %v894, %v897
        %vm899 = vcmp.lt.s32.totalorder %v898, 0
        %v900 = vsub.s32 0, %v898
        %v901 = vsel %vm899, %v900, %v898
        %v902 = vclz %v901
        %v903 = vsub.s32 %v902, 2
        %vm904 = vcmp.gt.s32.totalorder 0, %v903
        %v905 = vsel %vm904, 0, %v903
        %v906 = vsub.s32 32, %v905
        %v907 = vshll.u32 %v898, %v905
        %v908 = vshrl.u32 %v890, %v906
        %v909 = vor.u32 %v907, %v908
        %v910 = vsub.s32 4294967266, %v905
        %v911 = vadd.s32 %v910, 127
        %v912 = vshll.u32 %v911, 23
        %v913 = vor.u32 4788187, %v912
        %v914 = vand.u32 2147483647, %v913
        %v916 = vcvt.s32.f32 %v909
        %v917 = vmul.f32 %v916, %v914
        %v918 = vxor.u32 %v917, 2147483648
        %v919 = vsel %vm836, %v918, %v917
        %v920 = vsub.s32 4, %v896
        %v921 = vsel %vm836, %v920, %v896
        %v922 = vsel %vm835, %v315, %v919
        %v923 = vsel %vm835, 0, %v921
        %v924 = vcosq.f32.pop %v922
        %v925 = vsinq.f32.pop %v922
        %vm926 = vweird.f32 %v315
        %v927 = vadd.s32 %v923, 3
        %v928 = vand.u32 %v927, 3
        %vm929 = vcmp.lt.s32.totalorder %v928, 2
        %vm930 = vcmp.eq.s32.totalorder %v928, 0
        %v931 = vxor.u32 %v925, 2147483648
        %v932 = vsel %vm930, %v924, %v931
        %vm933 = vcmp.eq.s32.totalorder %v928, 2
        %v934 = vxor.u32 %v924, 2147483648
        %v935 = vsel %vm933, %v934, %v925
        %v936 = vsel %vm929, %v932, %v935
        %v937 = vsel %vm926, nan, %v936
        %v938 = vand.u32 2147483647, %v316
        %vm939 = vcmp.le.f32.partialorder %v938, 0.7853982
        %vm940 = vcmp.lt.s32.totalorder %v316, 0
        %v941 = vand.u32 %v316, 2139095040
        %v942 = vshrl.u32 %v941, 23
        %v943 = vsub.s32 %v942, 127
        %v944 = vand.u32 2147483647, %v316
        %v945 = vand.u32 %v944, 8388607
        %v946 = vor.u32 %v945, 8388608
        %v947 = vsub.s32 0, %v946
        %v948 = vadd.s32 %v943, 1
        %vm949 = vcmp.gt.s32.totalorder %v948, 0
        %v950 = vsel %vm949, %v948, 0
        %v951 = vshrl.u32 %v950, 5
        %v952 = vand.u32 %v950, 31
        %v953 = vsub.s32 32, %v952
        %v954 = vshrl.u32 683565275, %v953
        %v955 = vshll.u32 683565275, %v952
        %v956 = vshrl.u32 2475754826, %v953
        %v957 = vor.u32 %v955, %v956
        %v958 = vshll.u32 2475754826, %v952
        %v959 = vshrl.u32 2131351028, %v953
        %v960 = vor.u32 %v958, %v959
        %v961 = vshll.u32 2131351028, %v952
        %v962 = vshrl.u32 2102212464, %v953
        %v963 = vor.u32 %v961, %v962
        %v964 = vshll.u32 2102212464, %v952
        %v965 = vshrl.u32 920167782, %v953
        %v966 = vor.u32 %v964, %v965
        %v967 = vshll.u32 920167782, %v952
        %v968 = vshrl.u32 1326507024, %v953
        %v969 = vor.u32 %v967, %v968
        %vm970 = vcmp.lt.s32.totalorder %v951, 1
        %vm971 = vcmp.lt.s32.totalorder %v951, 2
        %vm972 = vcmp.lt.s32.totalorder %v951, 3
        %vm973 = vcmp.lt.s32.totalorder %v951, 4
        %v974 = vsel %vm970, %v954, %v957
        %v975 = vsel %vm973, %v963, 2102212464
        %v976 = vsel %vm972, %v960, %v975
        %v977 = vsel %vm971, %v974, %v976
        %v978 = vsel %vm970, %v957, %v960
        %v979 = vsel %vm973, %v966, 920167782
        %v980 = vsel %vm972, %v963, %v979
        %v981 = vsel %vm971, %v978, %v980
        %v982 = vsel %vm970, %v960, %v963
        %v983 = vsel %vm973, %v969, 1326507024
        %v984 = vsel %vm972, %v966, %v983
        %v985 = vsel %vm971, %v982, %v984
        %v986 = vshll.u32 %v946, 8
        %v987 = vmul.u32.u64.compose %v986, %v985
        %v988 = vextract.low.u32 %v987
        %v989 = vextract.high.u32 %v987
        %v990 = vmul.u32.u64.compose %v986, %v981
        %v991 = vextract.low.u32 %v990
        %v992 = vextract.high.u32 %v990
        %v993 = vmul.u32 %v986, %v977
        %v994 = vadd.s32 %v989, %v991
        %vm995 = vc.u32 %v989, %v991
        %v996 = vadd.s32 %v992, 1
        %v997 = vsel %vm995, %v996, %v992
        %v998 = vadd.s32 %v993, %v997
        %v999 = vadd.s32 %v998, 536870912
        %v1000 = vshrl.u32 %v999, 30
        %v1001 = vshll.u32 %v1000, 30
        %v1002 = vsub.s32 %v998, %v1001
        %vm1003 = vcmp.lt.s32.totalorder %v1002, 0
        %v1004 = vsub.s32 0, %v1002
        %v1005 = vsel %vm1003, %v1004, %v1002
        %v1006 = vclz %v1005
        %v1007 = vsub.s32 %v1006, 2
        %vm1008 = vcmp.gt.s32.totalorder 0, %v1007
        %v1009 = vsel %vm1008, 0, %v1007
        %v1010 = vsub.s32 32, %v1009
        %v1011 = vshll.u32 %v1002, %v1009
        %v1012 = vshrl.u32 %v994, %v1010
        %v1013 = vor.u32 %v1011, %v1012
        %v1014 = vsub.s32 4294967266, %v1009
        %v1015 = vadd.s32 %v1014, 127
        %v1016 = vshll.u32 %v1015, 23
        %v1017 = vor.u32 4788187, %v1016
        %v1018 = vand.u32 2147483647, %v1017
        %v1020 = vcvt.s32.f32 %v1013
        %v1021 = vmul.f32 %v1020, %v1018
        %v1022 = vxor.u32 %v1021, 2147483648
        %v1023 = vsel %vm940, %v1022, %v1021
        %v1024 = vsub.s32 4, %v1000
        %v1025 = vsel %vm940, %v1024, %v1000
        %v1026 = vsel %vm939, %v316, %v1023
        %v1027 = vsel %vm939, 0, %v1025
        %v1028 = vcosq.f32.pop %v1026
        %v1029 = vsinq.f32.pop %v1026
        %vm1030 = vweird.f32 %v316
        %v1031 = vadd.s32 %v1027, 3
        %v1032 = vand.u32 %v1031, 3
        %vm1033 = vcmp.lt.s32.totalorder %v1032, 2
        %vm1034 = vcmp.eq.s32.totalorder %v1032, 0
        %v1035 = vxor.u32 %v1029, 2147483648
        %v1036 = vsel %vm1034, %v1028, %v1035
        %vm1037 = vcmp.eq.s32.totalorder %v1032, 2
        %v1038 = vxor.u32 %v1028, 2147483648
        %v1039 = vsel %vm1037, %v1038, %v1029
        %v1040 = vsel %vm1033, %v1036, %v1039
        %v1041 = vsel %vm1030, nan, %v1040
        %v1042 = vand.u32 2147483647, %v317
        %vm1043 = vcmp.le.f32.partialorder %v1042, 0.7853982
        %vm1044 = vcmp.lt.s32.totalorder %v317, 0
        %v1045 = vand.u32 %v317, 2139095040
        %v1046 = vshrl.u32 %v1045, 23
        %v1047 = vsub.s32 %v1046, 127
        %v1048 = vand.u32 2147483647, %v317
        %v1049 = vand.u32 %v1048, 8388607
        %v1050 = vor.u32 %v1049, 8388608
        %v1051 = vsub.s32 0, %v1050
        %v1052 = vadd.s32 %v1047, 1
        %vm1053 = vcmp.gt.s32.totalorder %v1052, 0
        %v1054 = vsel %vm1053, %v1052, 0
        %v1055 = vshrl.u32 %v1054, 5
        %v1056 = vand.u32 %v1054, 31
        %v1057 = vsub.s32 32, %v1056
        %v1058 = vshrl.u32 683565275, %v1057
        %v1059 = vshll.u32 683565275, %v1056
        %v1060 = vshrl.u32 2475754826, %v1057
        %v1061 = vor.u32 %v1059, %v1060
        %v1062 = vshll.u32 2475754826, %v1056
        %v1063 = vshrl.u32 2131351028, %v1057
        %v1064 = vor.u32 %v1062, %v1063
        %v1065 = vshll.u32 2131351028, %v1056
        %v1066 = vshrl.u32 2102212464, %v1057
        %v1067 = vor.u32 %v1065, %v1066
        %v1068 = vshll.u32 2102212464, %v1056
        %v1069 = vshrl.u32 920167782, %v1057
        %v1070 = vor.u32 %v1068, %v1069
        %v1071 = vshll.u32 920167782, %v1056
        %v1072 = vshrl.u32 1326507024, %v1057
        %v1073 = vor.u32 %v1071, %v1072
        %vm1074 = vcmp.lt.s32.totalorder %v1055, 1
        %vm1075 = vcmp.lt.s32.totalorder %v1055, 2
        %vm1076 = vcmp.lt.s32.totalorder %v1055, 3
        %vm1077 = vcmp.lt.s32.totalorder %v1055, 4
        %v1078 = vsel %vm1074, %v1058, %v1061
        %v1079 = vsel %vm1077, %v1067, 2102212464
        %v1080 = vsel %vm1076, %v1064, %v1079
        %v1081 = vsel %vm1075, %v1078, %v1080
        %v1082 = vsel %vm1074, %v1061, %v1064
        %v1083 = vsel %vm1077, %v1070, 920167782
        %v1084 = vsel %vm1076, %v1067, %v1083
        %v1085 = vsel %vm1075, %v1082, %v1084
        %v1086 = vsel %vm1074, %v1064, %v1067
        %v1087 = vsel %vm1077, %v1073, 1326507024
        %v1088 = vsel %vm1076, %v1070, %v1087
        %v1089 = vsel %vm1075, %v1086, %v1088
        %v1090 = vshll.u32 %v1050, 8
        %v1091 = vmul.u32.u64.compose %v1090, %v1089
        %v1092 = vextract.low.u32 %v1091
        %v1093 = vextract.high.u32 %v1091
        %v1094 = vmul.u32.u64.compose %v1090, %v1085
        %v1095 = vextract.low.u32 %v1094
        %v1096 = vextract.high.u32 %v1094
        %v1097 = vmul.u32 %v1090, %v1081
        %v1098 = vadd.s32 %v1093, %v1095
        %vm1099 = vc.u32 %v1093, %v1095
        %v1100 = vadd.s32 %v1096, 1
        %v1101 = vsel %vm1099, %v1100, %v1096
        %v1102 = vadd.s32 %v1097, %v1101
        %v1103 = vadd.s32 %v1102, 536870912
        %v1104 = vshrl.u32 %v1103, 30
        %v1105 = vshll.u32 %v1104, 30
        %v1106 = vsub.s32 %v1102, %v1105
        %vm1107 = vcmp.lt.s32.totalorder %v1106, 0
        %v1108 = vsub.s32 0, %v1106
        %v1109 = vsel %vm1107, %v1108, %v1106
        %v1110 = vclz %v1109
        %v1111 = vsub.s32 %v1110, 2
        %vm1112 = vcmp.gt.s32.totalorder 0, %v1111
        %v1113 = vsel %vm1112, 0, %v1111
        %v1114 = vsub.s32 32, %v1113
        %v1115 = vshll.u32 %v1106, %v1113
        %v1116 = vshrl.u32 %v1098, %v1114
        %v1117 = vor.u32 %v1115, %v1116
        %v1118 = vsub.s32 4294967266, %v1113
        %v1119 = vadd.s32 %v1118, 127
        %v1120 = vshll.u32 %v1119, 23
        %v1121 = vor.u32 4788187, %v1120
        %v1122 = vand.u32 2147483647, %v1121
        %v1124 = vcvt.s32.f32 %v1117
        %v1125 = vmul.f32 %v1124, %v1122
        %v1126 = vxor.u32 %v1125, 2147483648
        %v1127 = vsel %vm1044, %v1126, %v1125
        %v1128 = vsub.s32 4, %v1104
        %v1129 = vsel %vm1044, %v1128, %v1104
        %v1130 = vsel %vm1043, %v317, %v1127
        %v1131 = vsel %vm1043, 0, %v1129
        %v1132 = vcosq.f32.pop %v1130
        %v1133 = vsinq.f32.pop %v1130
        %vm1134 = vweird.f32 %v317
        %v1135 = vadd.s32 %v1131, 3
        %v1136 = vand.u32 %v1135, 3
        %vm1137 = vcmp.lt.s32.totalorder %v1136, 2
        %vm1138 = vcmp.eq.s32.totalorder %v1136, 0
        %v1139 = vxor.u32 %v1133, 2147483648
        %v1140 = vsel %vm1138, %v1132, %v1139
        %vm1141 = vcmp.eq.s32.totalorder %v1136, 2
        %v1142 = vxor.u32 %v1132, 2147483648
        %v1143 = vsel %vm1141, %v1142, %v1133
        %v1144 = vsel %vm1137, %v1140, %v1143
        %v1145 = vsel %vm1134, nan, %v1144
        %v1146 = vpack.c.bf16 %v523, %v420
        %v1147 = vpack.c.bf16 %v937, %v833
        %v1148 = vpack.c.bf16 %v729, %v626
        %v1149 = vpack.c.bf16 %v1145, %v1041
        %v1150 = vld [vmem:[#allocation2] sm:$0xff]
        %v1151 = vld [vmem:[#allocation2 + $0x8] sm:$0xff]
        %v1152 = vld [vmem:[#allocation2 + $0x10] sm:$0xff]
        %v1153 = vld [vmem:[#allocation2 + $0x18] sm:$0xff]
        %v1154 = vld [vmem:[#allocation2 + $0x20] sm:$0xff]
        %v1155 = vld [vmem:[#allocation2 + $0x28] sm:$0xff]
        %v1156 = vld [vmem:[#allocation2 + $0x30] sm:$0xff]
        %v1157 = vld [vmem:[#allocation2 + $0x38] sm:$0xff]
        %v1158 = vld [vmem:[#allocation2 + $0x40] sm:$0xff]
        %v1159 = vld [vmem:[#allocation2 + $0x48] sm:$0xff]
        %v1160 = vld [vmem:[#allocation2 + $0x50] sm:$0xff]
        %v1161 = vld [vmem:[#allocation2 + $0x58] sm:$0xff]
        %v1162 = vld [vmem:[#allocation2 + $0x60] sm:$0xff]
        %v1163 = vld [vmem:[#allocation2 + $0x68] sm:$0xff]
        %v1164 = vld [vmem:[#allocation2 + $0x70] sm:$0xff]
        %v1165 = vld [vmem:[#allocation2 + $0x78] sm:$0xff]
        %v1166 = vld [vmem:[#allocation2 + $0x80] sm:$0xff]
        %v1167 = vld [vmem:[#allocation2 + $0x88] sm:$0xff]
        %v1168 = vld [vmem:[#allocation2 + $0x90] sm:$0xff]
        %v1169 = vld [vmem:[#allocation2 + $0x98] sm:$0xff]
        %v1170 = vld [vmem:[#allocation2 + $0xa0] sm:$0xff]
        %v1171 = vld [vmem:[#allocation2 + $0xa8] sm:$0xff]
        %v1172 = vld [vmem:[#allocation2 + $0xb0] sm:$0xff]
        %v1173 = vld [vmem:[#allocation2 + $0xb8] sm:$0xff]
        %v1174 = vld [vmem:[#allocation2 + $0xc0] sm:$0xff]
        %v1175 = vld [vmem:[#allocation2 + $0xc8] sm:$0xff]
        %v1176 = vld [vmem:[#allocation2 + $0xd0] sm:$0xff]
        %v1177 = vld [vmem:[#allocation2 + $0xd8] sm:$0xff]
        %v1178 = vld [vmem:[#allocation2 + $0xe0] sm:$0xff]
        %v1179 = vld [vmem:[#allocation2 + $0xe8] sm:$0xff]
        %v1180 = vld [vmem:[#allocation2 + $0xf0] sm:$0xff]
        %v1181 = vld [vmem:[#allocation2 + $0xf8] sm:$0xff]
        %v1182 = vld [vmem:[%s3] sm:$0x3]
        %v1184 = vlaneseq
        %v1185 = vshrl.u32 %v1184, 7
        %v1186 = vsub.s32 0, %v1185
        %v1187 = vrot.slane %v1182, %v1186
        %v1188 = vlaneseq
        %v1189 = vshrl.u32 %v1188, 7
        %v1190 = vsub.s32 1, %v1189
        %v1191 = vrot.slane %v1182, %v1190
        %v1226 = vunpack.c.l.b16 %v1150
        %v1227 = vunpack.c.h.b16 %v1150
        %v1228 = vunpack.c.l.b16 %v1151
        %v1229 = vunpack.c.h.b16 %v1151
        %v1230 = vunpack.c.l.b16 %v1152
        %v1231 = vunpack.c.h.b16 %v1152
        %v1232 = vunpack.c.l.b16 %v1153
        %v1233 = vunpack.c.h.b16 %v1153
        %v1234 = vunpack.c.l.b16 %v1154
        %v1235 = vunpack.c.h.b16 %v1154
        %v1236 = vunpack.c.l.b16 %v1155
        %v1237 = vunpack.c.h.b16 %v1155
        %v1238 = vunpack.c.l.b16 %v1156
        %v1239 = vunpack.c.h.b16 %v1156
        %v1240 = vunpack.c.l.b16 %v1157
        %v1241 = vunpack.c.h.b16 %v1157
        %v1242 = vunpack.c.l.b16 %v1158
        %v1243 = vunpack.c.h.b16 %v1158
        %v1244 = vunpack.c.l.b16 %v1159
        %v1245 = vunpack.c.h.b16 %v1159
        %v1246 = vunpack.c.l.b16 %v1160
        %v1247 = vunpack.c.h.b16 %v1160
        %v1248 = vunpack.c.l.b16 %v1161
        %v1249 = vunpack.c.h.b16 %v1161
        %v1250 = vunpack.c.l.b16 %v1162
        %v1251 = vunpack.c.h.b16 %v1162
        %v1252 = vunpack.c.l.b16 %v1163
        %v1253 = vunpack.c.h.b16 %v1163
        %v1254 = vunpack.c.l.b16 %v1164
        %v1255 = vunpack.c.h.b16 %v1164
        %v1256 = vunpack.c.l.b16 %v1165
        %v1257 = vunpack.c.h.b16 %v1165
        %v1258 = vunpack.c.l.b16 %v1166
        %v1259 = vunpack.c.h.b16 %v1166
        %v1260 = vunpack.c.l.b16 %v1167
        %v1261 = vunpack.c.h.b16 %v1167
        %v1262 = vunpack.c.l.b16 %v1168
        %v1263 = vunpack.c.h.b16 %v1168
        %v1264 = vunpack.c.l.b16 %v1169
        %v1265 = vunpack.c.h.b16 %v1169
        %v1266 = vunpack.c.l.b16 %v1170
        %v1267 = vunpack.c.h.b16 %v1170
        %v1268 = vunpack.c.l.b16 %v1171
        %v1269 = vunpack.c.h.b16 %v1171
        %v1270 = vunpack.c.l.b16 %v1172
        %v1271 = vunpack.c.h.b16 %v1172
        %v1272 = vunpack.c.l.b16 %v1173
        %v1273 = vunpack.c.h.b16 %v1173
        %v1274 = vunpack.c.l.b16 %v1174
        %v1275 = vunpack.c.h.b16 %v1174
        %v1276 = vunpack.c.l.b16 %v1175
        %v1277 = vunpack.c.h.b16 %v1175
        %v1278 = vunpack.c.l.b16 %v1176
        %v1279 = vunpack.c.h.b16 %v1176
        %v1280 = vunpack.c.l.b16 %v1177
        %v1281 = vunpack.c.h.b16 %v1177
        %v1282 = vunpack.c.l.b16 %v1178
        %v1283 = vunpack.c.h.b16 %v1178
        %v1284 = vunpack.c.l.b16 %v1179
        %v1285 = vunpack.c.h.b16 %v1179
        %v1286 = vunpack.c.l.b16 %v1180
        %v1287 = vunpack.c.h.b16 %v1180
        %v1288 = vunpack.c.l.b16 %v1181
        %v1289 = vunpack.c.h.b16 %v1181
        %v1290 = vpack.c.b16 %v1228, %v1226
        %v1291 = vpack.c.b16 %v1229, %v1227
        %v1292 = vpack.c.b16 %v1232, %v1230
        %v1293 = vpack.c.b16 %v1233, %v1231
        %v1294 = vpack.c.b16 %v1236, %v1234
        %v1295 = vpack.c.b16 %v1237, %v1235
        %v1296 = vpack.c.b16 %v1240, %v1238
        %v1297 = vpack.c.b16 %v1241, %v1239
        %v1298 = vpack.c.b16 %v1244, %v1242
        %v1299 = vpack.c.b16 %v1245, %v1243
        %v1300 = vpack.c.b16 %v1248, %v1246
        %v1301 = vpack.c.b16 %v1249, %v1247
        %v1302 = vpack.c.b16 %v1252, %v1250
        %v1303 = vpack.c.b16 %v1253, %v1251
        %v1304 = vpack.c.b16 %v1256, %v1254
        %v1305 = vpack.c.b16 %v1257, %v1255
        %v1306 = vpack.c.b16 %v1260, %v1258
        %v1307 = vpack.c.b16 %v1261, %v1259
        %v1308 = vpack.c.b16 %v1264, %v1262
        %v1309 = vpack.c.b16 %v1265, %v1263
        %v1310 = vpack.c.b16 %v1268, %v1266
        %v1311 = vpack.c.b16 %v1269, %v1267
        %v1312 = vpack.c.b16 %v1272, %v1270
        %v1313 = vpack.c.b16 %v1273, %v1271
        %v1314 = vpack.c.b16 %v1276, %v1274
        %v1315 = vpack.c.b16 %v1277, %v1275
        %v1316 = vpack.c.b16 %v1280, %v1278
        %v1317 = vpack.c.b16 %v1281, %v1279
        %v1318 = vpack.c.b16 %v1284, %v1282
        %v1319 = vpack.c.b16 %v1285, %v1283
        %v1320 = vpack.c.b16 %v1288, %v1286
        %v1321 = vpack.c.b16 %v1289, %v1287
        %1354 = vmatprep.subr.bf16.mxu0 %v1305
        %1355 = vmatpush1.bf16.msra.mxu0 %v1304
        %1356 = vmatprep.subr.bf16.mxu0 %v1303
        %1357 = vmatpush1.bf16.msra.mxu0 %v1302
        %1358 = vmatprep.subr.bf16.mxu0 %v1301
        %1359 = vmatpush1.bf16.msra.mxu0 %v1300
        %1360 = vmatprep.subr.bf16.mxu0 %v1299
        %1361 = vmatpush1.bf16.msra.mxu0 %v1298
        %1362 = vmatprep.subr.bf16.mxu0 %v1297
        %1363 = vmatpush1.bf16.msra.mxu0 %v1296
        %1364 = vmatprep.subr.bf16.mxu0 %v1295
        %1365 = vmatpush1.bf16.msra.mxu0 %v1294
        %1366 = vmatprep.subr.bf16.mxu0 %v1293
        %1367 = vmatpush1.bf16.msra.mxu0 %v1292
        %1368 = vmatprep.subr.bf16.mxu0 %v1291
        %1369 = vmatpush1.bf16.msra.mxu0 %v1290
        %1370 = vmatprep.subr.bf16.mxu0 %v1321
        %1371 = vmatpush2.bf16.msra.mxu0 %v1320
        %1372 = vmatprep.subr.bf16.mxu0 %v1319
        %1373 = vmatpush2.bf16.msra.mxu0 %v1318
        %1374 = vmatprep.subr.bf16.mxu0 %v1317
        %1375 = vmatpush2.bf16.msra.mxu0 %v1316
        %1376 = vmatprep.subr.bf16.mxu0 %v1315
        %1377 = vmatpush2.bf16.msra.mxu0 %v1314
        %1378 = vmatprep.subr.bf16.mxu0 %v1313
        %1379 = vmatpush2.bf16.msra.mxu0 %v1312
        %1380 = vmatprep.subr.bf16.mxu0 %v1311
        %1381 = vmatpush2.bf16.msra.mxu0 %v1310
        %1382 = vmatprep.subr.bf16.mxu0 %v1309
        %1383 = vmatpush2.bf16.msra.mxu0 %v1308
        %1384 = vmatprep.subr.bf16.mxu0 %v1307
        %1385 = vmatpush2.bf16.msra.mxu0 %v1306
        %1386 = vmatprep.mubr.bf16.mxu0 %v1147
        %1387 = vmatmul.mubr.bf16.gmra.mxu0 %v1146
        %v1388 = vpop.f32.mrf.mxu0
        %v1389 = vadd.f32 %v1187, %v1388
        %v1390 = vpop.f32.mrf.mxu0
        %v1391 = vadd.f32 %v1191, %v1390
        %v1392 = vpop.f32.mrf.mxu0
        %v1393 = vadd.f32 %v1187, %v1392
        %v1394 = vpop.f32.mrf.mxu0
        %v1395 = vadd.f32 %v1191, %v1394
        %1396 = vmatprep.mubr.bf16.mxu0 %v1149
        %1397 = vmatmul.mubr.bf16.gmra.mxu0 %v1148
        %v1398 = vpop.f32.mrf.mxu0
        %v1399 = vadd.f32 %v1187, %v1398
        %v1400 = vpop.f32.mrf.mxu0
        %v1401 = vadd.f32 %v1191, %v1400
        %v1402 = vpop.f32.mrf.mxu0
        %v1403 = vadd.f32 %v1187, %v1402
        %v1404 = vpop.f32.mrf.mxu0
        %v1405 = vadd.f32 %v1191, %v1404
        %1406 = vdwg.mxu0
        %v1407 = vsub.f32 0.0, %v1389
        %v1408 = vsub.f32 0.0, %v1391
        %v1409 = vsub.f32 0.0, %v1393
        %v1410 = vsub.f32 0.0, %v1395
        %v1411 = vsub.f32 0.0, %v1399
        %v1412 = vsub.f32 0.0, %v1401
        %v1413 = vsub.f32 0.0, %v1403
        %v1414 = vsub.f32 0.0, %v1405
        %v1415 = vmul.f32 %v1407, 1.442695
        %v1416 = vpow.pop %v1415
        %v1417 = vmul.f32 %v1408, 1.442695
        %v1418 = vpow.pop %v1417
        %v1419 = vmul.f32 %v1409, 1.442695
        %v1420 = vpow.pop %v1419
        %v1421 = vmul.f32 %v1410, 1.442695
        %v1422 = vpow.pop %v1421
        %v1423 = vmul.f32 %v1411, 1.442695
        %v1424 = vpow.pop %v1423
        %v1425 = vmul.f32 %v1412, 1.442695
        %v1426 = vpow.pop %v1425
        %v1427 = vmul.f32 %v1413, 1.442695
        %v1428 = vpow.pop %v1427
        %v1429 = vmul.f32 %v1414, 1.442695
        %v1430 = vpow.pop %v1429
        %v1431 = vadd.f32 %v1416, 1.0
        %v1432 = vadd.f32 %v1418, 1.0
        %v1433 = vadd.f32 %v1420, 1.0
        %v1434 = vadd.f32 %v1422, 1.0
        %v1435 = vadd.f32 %v1424, 1.0
        %v1436 = vadd.f32 %v1426, 1.0
        %v1437 = vadd.f32 %v1428, 1.0
        %v1438 = vadd.f32 %v1430, 1.0
        %v1439 = vrcp.pop %v1431
        %v1440 = vrcp.pop %v1432
        %v1441 = vrcp.pop %v1433
        %v1442 = vrcp.pop %v1434
        %v1443 = vrcp.pop %v1435
        %v1444 = vrcp.pop %v1436
        %v1445 = vrcp.pop %v1437
        %v1446 = vrcp.pop %v1438
        %v1447 = vmul.f32 %v1389, %v1439
        %v1448 = vmul.f32 %v1391, %v1440
        %v1449 = vmul.f32 %v1393, %v1441
        %v1450 = vmul.f32 %v1395, %v1442
        %v1451 = vmul.f32 %v1399, %v1443
        %v1452 = vmul.f32 %v1401, %v1444
        %v1453 = vmul.f32 %v1403, %v1445
        %v1454 = vmul.f32 %v1405, %v1446
        %v1455 = vpack.c.bf16 %v1449, %v1447
        %v1456 = vpack.c.bf16 %v1450, %v1448
        %v1457 = vpack.c.bf16 %v1453, %v1451
        %v1458 = vpack.c.bf16 %v1454, %v1452
        %v1459 = vld [vmem:[#allocation5] sm:$0xff]
        %v1460 = vld [vmem:[#allocation5 + $0x8] sm:$0xff]
        %v1461 = vld [vmem:[#allocation5 + $0x10] sm:$0xff]
        %v1462 = vld [vmem:[#allocation5 + $0x18] sm:$0xff]
        %v1463 = vld [vmem:[#allocation5 + $0x20] sm:$0xff]
        %v1464 = vld [vmem:[#allocation5 + $0x28] sm:$0xff]
        %v1465 = vld [vmem:[#allocation5 + $0x30] sm:$0xff]
        %v1466 = vld [vmem:[#allocation5 + $0x38] sm:$0xff]
        %v1467 = vld [vmem:[#allocation5 + $0x40] sm:$0xff]
        %v1468 = vld [vmem:[#allocation5 + $0x48] sm:$0xff]
        %v1469 = vld [vmem:[#allocation5 + $0x50] sm:$0xff]
        %v1470 = vld [vmem:[#allocation5 + $0x58] sm:$0xff]
        %v1471 = vld [vmem:[#allocation5 + $0x60] sm:$0xff]
        %v1472 = vld [vmem:[#allocation5 + $0x68] sm:$0xff]
        %v1473 = vld [vmem:[#allocation5 + $0x70] sm:$0xff]
        %v1474 = vld [vmem:[#allocation5 + $0x78] sm:$0xff]
        %v1475 = vld [vmem:[#allocation5 + $0x80] sm:$0xff]
        %v1476 = vld [vmem:[#allocation5 + $0x88] sm:$0xff]
        %v1477 = vld [vmem:[#allocation5 + $0x90] sm:$0xff]
        %v1478 = vld [vmem:[#allocation5 + $0x98] sm:$0xff]
        %v1479 = vld [vmem:[#allocation5 + $0xa0] sm:$0xff]
        %v1480 = vld [vmem:[#allocation5 + $0xa8] sm:$0xff]
        %v1481 = vld [vmem:[#allocation5 + $0xb0] sm:$0xff]
        %v1482 = vld [vmem:[#allocation5 + $0xb8] sm:$0xff]
        %v1483 = vld [vmem:[#allocation5 + $0xc0] sm:$0xff]
        %v1484 = vld [vmem:[#allocation5 + $0xc8] sm:$0xff]
        %v1485 = vld [vmem:[#allocation5 + $0xd0] sm:$0xff]
        %v1486 = vld [vmem:[#allocation5 + $0xd8] sm:$0xff]
        %v1487 = vld [vmem:[#allocation5 + $0xe0] sm:$0xff]
        %v1488 = vld [vmem:[#allocation5 + $0xe8] sm:$0xff]
        %v1489 = vld [vmem:[#allocation5 + $0xf0] sm:$0xff]
        %v1490 = vld [vmem:[#allocation5 + $0xf8] sm:$0xff]
        %v1491 = vld [vmem:[%s5] sm:$0x3]
        %v1493 = vlaneseq
        %v1494 = vshrl.u32 %v1493, 7
        %v1495 = vsub.s32 0, %v1494
        %v1496 = vrot.slane %v1491, %v1495
        %v1497 = vlaneseq
        %v1498 = vshrl.u32 %v1497, 7
        %v1499 = vsub.s32 1, %v1498
        %v1500 = vrot.slane %v1491, %v1499
        %v1535 = vunpack.c.l.b16 %v1459
        %v1536 = vunpack.c.h.b16 %v1459
        %v1537 = vunpack.c.l.b16 %v1460
        %v1538 = vunpack.c.h.b16 %v1460
        %v1539 = vunpack.c.l.b16 %v1461
        %v1540 = vunpack.c.h.b16 %v1461
        %v1541 = vunpack.c.l.b16 %v1462
        %v1542 = vunpack.c.h.b16 %v1462
        %v1543 = vunpack.c.l.b16 %v1463
        %v1544 = vunpack.c.h.b16 %v1463
        %v1545 = vunpack.c.l.b16 %v1464
        %v1546 = vunpack.c.h.b16 %v1464
        %v1547 = vunpack.c.l.b16 %v1465
        %v1548 = vunpack.c.h.b16 %v1465
        %v1549 = vunpack.c.l.b16 %v1466
        %v1550 = vunpack.c.h.b16 %v1466
        %v1551 = vunpack.c.l.b16 %v1467
        %v1552 = vunpack.c.h.b16 %v1467
        %v1553 = vunpack.c.l.b16 %v1468
        %v1554 = vunpack.c.h.b16 %v1468
        %v1555 = vunpack.c.l.b16 %v1469
        %v1556 = vunpack.c.h.b16 %v1469
        %v1557 = vunpack.c.l.b16 %v1470
        %v1558 = vunpack.c.h.b16 %v1470
        %v1559 = vunpack.c.l.b16 %v1471
        %v1560 = vunpack.c.h.b16 %v1471
        %v1561 = vunpack.c.l.b16 %v1472
        %v1562 = vunpack.c.h.b16 %v1472
        %v1563 = vunpack.c.l.b16 %v1473
        %v1564 = vunpack.c.h.b16 %v1473
        %v1565 = vunpack.c.l.b16 %v1474
        %v1566 = vunpack.c.h.b16 %v1474
        %v1567 = vunpack.c.l.b16 %v1475
        %v1568 = vunpack.c.h.b16 %v1475
        %v1569 = vunpack.c.l.b16 %v1476
        %v1570 = vunpack.c.h.b16 %v1476
        %v1571 = vunpack.c.l.b16 %v1477
        %v1572 = vunpack.c.h.b16 %v1477
        %v1573 = vunpack.c.l.b16 %v1478
        %v1574 = vunpack.c.h.b16 %v1478
        %v1575 = vunpack.c.l.b16 %v1479
        %v1576 = vunpack.c.h.b16 %v1479
        %v1577 = vunpack.c.l.b16 %v1480
        %v1578 = vunpack.c.h.b16 %v1480
        %v1579 = vunpack.c.l.b16 %v1481
        %v1580 = vunpack.c.h.b16 %v1481
        %v1581 = vunpack.c.l.b16 %v1482
        %v1582 = vunpack.c.h.b16 %v1482
        %v1583 = vunpack.c.l.b16 %v1483
        %v1584 = vunpack.c.h.b16 %v1483
        %v1585 = vunpack.c.l.b16 %v1484
        %v1586 = vunpack.c.h.b16 %v1484
        %v1587 = vunpack.c.l.b16 %v1485
        %v1588 = vunpack.c.h.b16 %v1485
        %v1589 = vunpack.c.l.b16 %v1486
        %v1590 = vunpack.c.h.b16 %v1486
        %v1591 = vunpack.c.l.b16 %v1487
        %v1592 = vunpack.c.h.b16 %v1487
        %v1593 = vunpack.c.l.b16 %v1488
        %v1594 = vunpack.c.h.b16 %v1488
        %v1595 = vunpack.c.l.b16 %v1489
        %v1596 = vunpack.c.h.b16 %v1489
        %v1597 = vunpack.c.l.b16 %v1490
        %v1598 = vunpack.c.h.b16 %v1490
        %v1599 = vpack.c.b16 %v1537, %v1535
        %v1600 = vpack.c.b16 %v1538, %v1536
        %v1601 = vpack.c.b16 %v1541, %v1539
        %v1602 = vpack.c.b16 %v1542, %v1540
        %v1603 = vpack.c.b16 %v1545, %v1543
        %v1604 = vpack.c.b16 %v1546, %v1544
        %v1605 = vpack.c.b16 %v1549, %v1547
        %v1606 = vpack.c.b16 %v1550, %v1548
        %v1607 = vpack.c.b16 %v1553, %v1551
        %v1608 = vpack.c.b16 %v1554, %v1552
        %v1609 = vpack.c.b16 %v1557, %v1555
        %v1610 = vpack.c.b16 %v1558, %v1556
        %v1611 = vpack.c.b16 %v1561, %v1559
        %v1612 = vpack.c.b16 %v1562, %v1560
        %v1613 = vpack.c.b16 %v1565, %v1563
        %v1614 = vpack.c.b16 %v1566, %v1564
        %v1615 = vpack.c.b16 %v1569, %v1567
        %v1616 = vpack.c.b16 %v1570, %v1568
        %v1617 = vpack.c.b16 %v1573, %v1571
        %v1618 = vpack.c.b16 %v1574, %v1572
        %v1619 = vpack.c.b16 %v1577, %v1575
        %v1620 = vpack.c.b16 %v1578, %v1576
        %v1621 = vpack.c.b16 %v1581, %v1579
        %v1622 = vpack.c.b16 %v1582, %v1580
        %v1623 = vpack.c.b16 %v1585, %v1583
        %v1624 = vpack.c.b16 %v1586, %v1584
        %v1625 = vpack.c.b16 %v1589, %v1587
        %v1626 = vpack.c.b16 %v1590, %v1588
        %v1627 = vpack.c.b16 %v1593, %v1591
        %v1628 = vpack.c.b16 %v1594, %v1592
        %v1629 = vpack.c.b16 %v1597, %v1595
        %v1630 = vpack.c.b16 %v1598, %v1596
        %1663 = vmatprep.subr.bf16.mxu0 %v1614
        %1664 = vmatpush1.bf16.msra.mxu0 %v1613
        %1665 = vmatprep.subr.bf16.mxu0 %v1612
        %1666 = vmatpush1.bf16.msra.mxu0 %v1611
        %1667 = vmatprep.subr.bf16.mxu0 %v1610
        %1668 = vmatpush1.bf16.msra.mxu0 %v1609
        %1669 = vmatprep.subr.bf16.mxu0 %v1608
        %1670 = vmatpush1.bf16.msra.mxu0 %v1607
        %1671 = vmatprep.subr.bf16.mxu0 %v1606
        %1672 = vmatpush1.bf16.msra.mxu0 %v1605
        %1673 = vmatprep.subr.bf16.mxu0 %v1604
        %1674 = vmatpush1.bf16.msra.mxu0 %v1603
        %1675 = vmatprep.subr.bf16.mxu0 %v1602
        %1676 = vmatpush1.bf16.msra.mxu0 %v1601
        %1677 = vmatprep.subr.bf16.mxu0 %v1600
        %1678 = vmatpush1.bf16.msra.mxu0 %v1599
        %1679 = vmatprep.subr.bf16.mxu0 %v1630
        %1680 = vmatpush2.bf16.msra.mxu0 %v1629
        %1681 = vmatprep.subr.bf16.mxu0 %v1628
        %1682 = vmatpush2.bf16.msra.mxu0 %v1627
        %1683 = vmatprep.subr.bf16.mxu0 %v1626
        %1684 = vmatpush2.bf16.msra.mxu0 %v1625
        %1685 = vmatprep.subr.bf16.mxu0 %v1624
        %1686 = vmatpush2.bf16.msra.mxu0 %v1623
        %1687 = vmatprep.subr.bf16.mxu0 %v1622
        %1688 = vmatpush2.bf16.msra.mxu0 %v1621
        %1689 = vmatprep.subr.bf16.mxu0 %v1620
        %1690 = vmatpush2.bf16.msra.mxu0 %v1619
        %1691 = vmatprep.subr.bf16.mxu0 %v1618
        %1692 = vmatpush2.bf16.msra.mxu0 %v1617
        %1693 = vmatprep.subr.bf16.mxu0 %v1616
        %1694 = vmatpush2.bf16.msra.mxu0 %v1615
        %1695 = vmatprep.mubr.bf16.mxu0 %v1456
        %1696 = vmatmul.mubr.bf16.gmra.mxu0 %v1455
        %v1697 = vpop.f32.mrf.mxu0
        %v1698 = vadd.f32 %v1496, %v1697
        %v1699 = vpop.f32.mrf.mxu0
        %v1700 = vadd.f32 %v1500, %v1699
        %v1701 = vpop.f32.mrf.mxu0
        %v1702 = vadd.f32 %v1496, %v1701
        %v1703 = vpop.f32.mrf.mxu0
        %v1704 = vadd.f32 %v1500, %v1703
        %1705 = vmatprep.mubr.bf16.mxu0 %v1458
        %1706 = vmatmul.mubr.bf16.gmra.mxu0 %v1457
        %v1707 = vpop.f32.mrf.mxu0
        %v1708 = vadd.f32 %v1496, %v1707
        %v1709 = vpop.f32.mrf.mxu0
        %v1710 = vadd.f32 %v1500, %v1709
        %v1711 = vpop.f32.mrf.mxu0
        %v1712 = vadd.f32 %v1496, %v1711
        %v1713 = vpop.f32.mrf.mxu0
        %v1714 = vadd.f32 %v1500, %v1713
        %1715 = vdwg.mxu0
        %v1716 = vpack.c.bf16 %v1702, %v1698
        %v1717 = vpack.c.bf16 %v1704, %v1700
        %v1718 = vpack.c.bf16 %v1712, %v1708
        %v1719 = vpack.c.bf16 %v1714, %v1710
        %v1724 = vunpack.c.l.b16 %v1716
        %v1725 = vunpack.c.l.b16 %v1717
        %v1726 = vunpack.c.h.b16 %v1716
        %v1727 = vunpack.c.h.b16 %v1717
        %v1728 = vunpack.c.l.b16 %v1718
        %v1729 = vunpack.c.l.b16 %v1719
        %v1730 = vunpack.c.h.b16 %v1718
        %v1731 = vunpack.c.h.b16 %v1719
        %v1732 = vpack.c.b16 %v1725, %v1724
        %v1733 = vpack.c.b16 %v1727, %v1726
        %v1734 = vpack.c.b16 %v1729, %v1728
        %v1735 = vpack.c.b16 %v1731, %v1730
        %1740 = vst [vmem:[%s275] sm:$0xff] %v1732
        %1741 = vst [vmem:[%s275 + $0x8] sm:$0xff] %v1733
        %1742 = vst [vmem:[%s275 + $0x10] sm:$0xff] %v1734
        %1743 = vst [vmem:[%s275 + $0x18] sm:$0xff] %v1735
        %s1744 = sand.u32 %s161, 1
        %s1745 = scalar_lea.sflag [#allocation4], %s1744
        %s1746 = sand.u32 %s161, 1
        %s1747 = smul.addr %s1746, 32
        %s1748 = scalar_lea.vmem [#allocation7], %s1747
        // Predicated region
        $region53: #{tpu_custom_call.1} parent=43 // pred_check
          %p1749 = pneg %p171
        $region54: #{tpu_custom_call.1} parent=43 // pred_check_branch
          %1751 = sbr.rel (%p1749) target = $region56
        $region55: #{tpu_custom_call.1} parent=43 // pred_region
          %s1752 = smul.u32 4, %s22
          %s1754 = ssub.s32 512, 512
          %1755 = vsyncadd %s1745, %s1754
          %s1756 = smul.addr %s1752, 2
          %s1757 = smul.addr %s1756, 64
          %s1758 = scalar_lea.hbm %s6, %s1757
          %s1759 = sshll.u32 %s1748, 4
          %s1760 = int_to_ptr.vmem [resolvable:$true] %s1759
          %1765 = dma.vmem_to_hbm [thread:$0]  %s1760, 512, %s1758, %s1745, 128, 128, 8
        $region56: #{tpu_custom_call.1} parent=43 // pred_fallthru
          _
      $region44: #{tpu_custom_call.1} parent=5 // pred_fallthru
        _
      %p1766 = scmp.le.s32.totalorder 2, %s17
      // Predicated region
      $region57: #{tpu_custom_call.1} parent=5 // pred_check
        %p1767 = pneg %p1766
      $region58: #{tpu_custom_call.1} parent=5 // pred_check_branch
        %1769 = sbr.rel (%p1767) target = $region60
      $region59: #{tpu_custom_call.1} parent=5 // pred_region
        %s1770 = ssub.s32 %s17, 2
        // Predicated region
        $region61: #{tpu_custom_call.1} parent=59 // pred_check
          %p1771 = pneg %p177
        $region62: #{tpu_custom_call.1} parent=59 // pred_check_branch
          %1773 = sbr.rel (%p1771) target = $region64
        $region63: #{tpu_custom_call.1} parent=59 // pred_region
          %s1774 = sand.u32 %s162, 1
          %s1775 = scalar_lea.sflag [#allocation4], %s1774
          %s1776 = sand.u32 %s162, 1
          %s1777 = smul.addr %s1776, 32
          %s1778 = scalar_lea.vmem [#allocation7], %s1777
          %1779 = dma.done %s1775, 512
        $region64: #{tpu_custom_call.1} parent=59 // pred_fallthru
          _
      $region60: #{tpu_custom_call.1} parent=5 // pred_fallthru
        _
    $region6: #{tpu_custom_call.1} parent=1 // loop_footer
      %s21 = sadd.s32 1, %s17
    $region7: #{tpu_custom_call.1} parent=1 // loop_footer_branch
      %16 = sbr.rel target = $region3
    $region8: #{tpu_custom_call.1} parent=1 // loop_exit
      _
    %1780 = vsyncpa [#allocation3], 1
    %s1781 = scalar_lea.sflag [#allocation3], 1
    %1782 = vsyncpa %s1781, 1
    %1783 = vsyncpa [#allocation6], 1
    %1784 = vsyncpa [#allocation4], 1
    %s1785 = scalar_lea.sflag [#allocation4], 1
    %1786 = vsyncpa %s1785, 1

</llo_original>
